<compile_context>
chip_gen: v6e
topology: v6e:2x2x1
jax: 0.10.0
libtpu: 0.0.40
codegen_flags: <defaults>
</compile_context>

<pallas_src>
import functools

import jax
import jax.numpy as jnp
from jax.experimental import pallas as pl
from jax.experimental.pallas import tpu as pltpu

SCALE = 0.7071067811865476  # sqrt(0.5), matches torch.sqrt(FloatTensor([0.5]))


# ---------------------- fused decoder-stack kernel --------------------------
def _decoder_stack_kernel(
    emb_ref,                  # (1, T, E)  token + positional embedding
    encc_t_ref,               # (1, E, S)  encoder_conved, pre-transposed
    encm_ref,                 # (1, S, E)  encoder_combined
    e2h_w_ref, e2h_b_ref,     # (E, H), (1, H)
    conv_w_ref, conv_b_ref,   # (L, K*H, 2H), (L, 1, 2H)
    ah2e_w_ref, ah2e_b_ref,   # (L, H, E), (L, 1, E)
    ae2h_w_ref, ae2h_b_ref,   # (L, E, H), (L, 1, H)
    h2e_w_ref, h2e_b_ref,     # (H, E), (1, E)
    fco_w_ref, fco_b_ref,     # (E, Vp), (1, Vp)   (Vp = vocab padded to 128k)
    out_ref,                  # (1, T, Vp)
    attn_ref,                 # (1, T, S)   last layer's attention only
    *,
    pad_val,
):
    n_layers, kh, h2 = conv_w_ref.shape
    hid = h2 // 2
    ksz = kh // hid
    T = emb_ref.shape[1]

    emb = emb_ref[0]                    # (T, E)
    encc_t = encc_t_ref[0]              # (E, S)
    encm = encm_ref[0]                  # (S, E)

    # emb2hid (dropout = identity, eval mode)
    x = jnp.dot(emb, e2h_w_ref[...],
                preferred_element_type=jnp.float32) + e2h_b_ref[...]   # (T, H)

    attn = None
    for l in range(n_layers):           # static unroll; activations stay in VMEM
        # causal left-pad with trg_pad_idx (faithful to the reference code),
        # then im2col:  lhs[t] = [p[t], p[t+1], ..., p[t+K-1]]  -> (T, K*H)
        pad_rows = jnp.full((ksz - 1, hid), pad_val, dtype=jnp.float32)
        p = jnp.concatenate([pad_rows, x], axis=0)                      # (T+K-1, H)
        lhs = jnp.concatenate([p[k:k + T, :] for k in range(ksz)], axis=1)

        # one wide matmul produces value+gate halves together
        conv = jnp.dot(lhs, conv_w_ref[l],
                       preferred_element_type=jnp.float32) + conv_b_ref[l]  # (T, 2H)
        glu = conv[:, :hid] * jax.nn.sigmoid(conv[:, hid:])             # (T, H)

        # attention
        conved_emb = jnp.dot(glu, ah2e_w_ref[l],
                             preferred_element_type=jnp.float32) + ah2e_b_ref[l]
        combined = (conved_emb + emb) * SCALE                           # (T, E)
        energy = jnp.dot(combined, encc_t,
                         preferred_element_type=jnp.float32)            # (T, S)
        m = jnp.max(energy, axis=-1, keepdims=True)
        e = jnp.exp(energy - m)
        attn = e * pl.reciprocal(jnp.sum(e, axis=-1, keepdims=True),
                                 approx=True)                           # softmax

        attended = jnp.dot(attn, encm,
                           preferred_element_type=jnp.float32)          # (T, E)
        attended = jnp.dot(attended, ae2h_w_ref[l],
                           preferred_element_type=jnp.float32) + ae2h_b_ref[l]
        attended_combined = (glu + attended) * SCALE                    # (T, H)
        x = (attended_combined + x) * SCALE                             # residual

    # hid2emb -> fc_out (dropout = identity)
    conved = jnp.dot(x, h2e_w_ref[...],
                     preferred_element_type=jnp.float32) + h2e_b_ref[...]   # (T, E)
    out = jnp.dot(conved, fco_w_ref[...],
                  preferred_element_type=jnp.float32) + fco_b_ref[...]      # (T, Vp)

    out_ref[0] = out.astype(out_ref.dtype)
    attn_ref[0] = attn.astype(attn_ref.dtype)


# ------------------------------- full forward -------------------------------
def decoder_cnn_forward(params, trg, encoder_conved, encoder_combined,
                        *, kernel_size, trg_pad_idx):
    del kernel_size  # derivable from the stacked conv weights
    B, T = trg.shape
    E = params["tok_emb"].shape[1]
    H = params["emb2hid_w"].shape[1]
    L, KH, H2 = params["conv_w"].shape
    V = params["fc_out_w"].shape[1]
    S = encoder_conved.shape[1]

    # embeddings (data-dependent gather -> plain-JAX glue)
    tok_embedded = jnp.take(params["tok_emb"], trg, axis=0)             # (B, T, E)
    pos_ids = jnp.arange(T, dtype=jnp.int32)
    pos_embedded = jnp.take(params["pos_emb"], pos_ids, axis=0)[None]   # (1, T, E)
    embedded = tok_embedded + pos_embedded                              # dropout = id

    # pre-transpose encoder_conved once so the energy matmul needs no
    # in-kernel transpose
    encc_t = jnp.transpose(encoder_conved, (0, 2, 1))                   # (B, E, S)

    # lane-dense fc_out: zero-pad the output dim to a multiple of 128; padded
    # columns are exactly 0 and are sliced off after the kernel.
    Vp = ((V + 127) // 128) * 128
    fco_w, fco_b = params["fc_out_w"], params["fc_out_b"]
    if Vp != V:
        fco_w = jnp.pad(fco_w, ((0, 0), (0, Vp - V)))
        fco_b = jnp.pad(fco_b, ((0, Vp - V),))

    kernel = functools.partial(_decoder_stack_kernel,
                               pad_val=float(trg_pad_idx))

    per_b = lambda shape: pl.BlockSpec(shape, lambda b: (b, 0, 0))
    rep2 = lambda shape: pl.BlockSpec(shape, lambda b: (0, 0))
    rep3 = lambda shape: pl.BlockSpec(shape, lambda b: (0, 0, 0))

    # NOTE: at realistic H/E/S on v7x (64 MiB VMEM) the replicated weight
    # blocks should be tiled and vmem_limit_bytes raised; trivial at these
    # shapes.
    out_p, attention = pl.pallas_call(
        kernel,
        out_shape=(jax.ShapeDtypeStruct((B, T, Vp), jnp.float32),
                   jax.ShapeDtypeStruct((B, T, S), jnp.float32)),
        grid=(B,),
        in_specs=[
            per_b((1, T, E)),                       # embedded
            per_b((1, E, S)),                       # encoder_conved^T
            per_b((1, S, E)),                       # encoder_combined
            rep2((E, H)), rep2((1, H)),             # emb2hid
            rep3((L, KH, H2)), rep3((L, 1, H2)),    # convs (stacked, flattened)
            rep3((L, H, E)), rep3((L, 1, E)),       # attn_hid2emb
            rep3((L, E, H)), rep3((L, 1, H)),       # attn_emb2hid
            rep2((H, E)), rep2((1, E)),             # hid2emb
            rep2((E, Vp)), rep2((1, Vp)),           # fc_out (lane-padded)
        ],
        out_specs=(per_b((1, T, Vp)), per_b((1, T, S))),
        compiler_params=pltpu.CompilerParams(
            dimension_semantics=("parallel",)),
    )(embedded, encc_t, encoder_combined,
      params["emb2hid_w"], params["emb2hid_b"].reshape(1, H),
      params["conv_w"], params["conv_b"].reshape(L, 1, H2),
      params["attn_hid2emb_w"], params["attn_hid2emb_b"].reshape(L, 1, E),
      params["attn_emb2hid_w"], params["attn_emb2hid_b"].reshape(L, 1, H),
      params["hid2emb_w"], params["hid2emb_b"].reshape(1, E),
      fco_w, fco_b.reshape(1, Vp))

    return out_p[..., :V], attention


# ------------------------------ parameter init ------------------------------
def init_params(key, output_dim, emb_dim, hid_dim, n_layers, kernel_size,
                max_length):
    def nrm(k, shape, scale=0.1):
        return (scale * jax.random.normal(k, shape)).astype(jnp.float32)

    keys = iter(jax.random.split(key, 14))
    return {
        "tok_emb": nrm(next(keys), (output_dim, emb_dim)),
        "pos_emb": nrm(next(keys), (max_length, emb_dim)),
        "emb2hid_w": nrm(next(keys), (emb_dim, hid_dim)),
        "emb2hid_b": nrm(next(keys), (hid_dim,)),
        "hid2emb_w": nrm(next(keys), (hid_dim, emb_dim)),
        "hid2emb_b": nrm(next(keys), (emb_dim,)),
        "fc_out_w": nrm(next(keys), (emb_dim, output_dim)),
        "fc_out_b": nrm(next(keys), (output_dim,)),
        # Stacked per-layer weights. A torch Conv1d weight (2H, H, K) maps to
        # conv_w[l] via w.permute(2, 1, 0).reshape(K*H, 2H): output columns
        # [0:H] are the GLU value half and [H:2H] the gate half, matching
        # F.glu(dim=1) channel ordering.
        "conv_w": nrm(next(keys), (n_layers, kernel_size * hid_dim, 2 * hid_dim)),
        "conv_b": nrm(next(keys), (n_layers, 2 * hid_dim)),
        "attn_hid2emb_w": nrm(next(keys), (n_layers, hid_dim, emb_dim)),
        "attn_hid2emb_b": nrm(next(keys), (n_layers, emb_dim)),
        "attn_emb2hid_w": nrm(next(keys), (n_layers, emb_dim, hid_dim)),
        "attn_emb2hid_b": nrm(next(keys), (n_layers, hid_dim)),
    }


if __name__ == "__main__":
    # module hyper-params
    output_dim, emb_dim, hid_dim = 50, 32, 32
    n_layers, kernel_size = 2, 3
    trg_pad_idx, max_length = 1, 100
    # input sizes
    B, T, S = 2, 8, 8

    key = jax.random.PRNGKey(0)
    k_par, k_trg, k_ec, k_em = jax.random.split(key, 4)

    params = init_params(k_par, output_dim, emb_dim, hid_dim, n_layers,
                         kernel_size, max_length)

    trg = jax.random.randint(k_trg, (B, T), 0, output_dim, dtype=jnp.int32)
    encoder_conved = jax.random.normal(k_ec, (B, S, emb_dim), dtype=jnp.float32)
    encoder_combined = jax.random.normal(k_em, (B, S, emb_dim), dtype=jnp.float32)

    fwd = jax.jit(functools.partial(decoder_cnn_forward,
                                    kernel_size=kernel_size,
                                    trg_pad_idx=trg_pad_idx))
    output, attention = fwd(params, trg, encoder_conved, encoder_combined)
    jax.block_until_ready((output, attention))

    assert output.shape == (B, T, output_dim)
    assert attention.shape == (B, T, S)
    assert bool(jnp.all(jnp.isfinite(output)))
    assert bool(jnp.all(jnp.isfinite(attention)))
    print("KERNEL_OK")
</pallas_src>

<mosaic_0001>
module attributes {stable_mosaic.version = 11 : i64} {
  func.func @_decoder_stack_kernel(%arg0: i32, %arg1: memref<1x8x32xf32, #tpu.memory_space<vmem>>, %arg2: memref<1x32x8xf32, #tpu.memory_space<vmem>>, %arg3: memref<1x8x32xf32, #tpu.memory_space<vmem>>, %arg4: memref<32x32xf32, #tpu.memory_space<vmem>>, %arg5: memref<1x32xf32, #tpu.memory_space<vmem>>, %arg6: memref<2x96x64xf32, #tpu.memory_space<vmem>>, %arg7: memref<2x1x64xf32, #tpu.memory_space<vmem>>, %arg8: memref<2x32x32xf32, #tpu.memory_space<vmem>>, %arg9: memref<2x1x32xf32, #tpu.memory_space<vmem>>, %arg10: memref<2x32x32xf32, #tpu.memory_space<vmem>>, %arg11: memref<2x1x32xf32, #tpu.memory_space<vmem>>, %arg12: memref<32x32xf32, #tpu.memory_space<vmem>>, %arg13: memref<1x32xf32, #tpu.memory_space<vmem>>, %arg14: memref<32x128xf32, #tpu.memory_space<vmem>>, %arg15: memref<1x128xf32, #tpu.memory_space<vmem>>, %arg16: memref<1x8x128xf32, #tpu.memory_space<vmem>>, %arg17: memref<1x8x8xf32, #tpu.memory_space<vmem>>) attributes {dimension_semantics = [#tpu.dimension_semantics<parallel>], iteration_bounds = array<i64: 2>, scalar_prefetch = 0 : i64, scratch_operands = 0 : i64, tpu.core_type = #tpu.core_type<tc>, window_params = [{transform_indices = @transform_0, window_bounds = array<i64: 1, 8, 32>}, {transform_indices = @transform_1, window_bounds = array<i64: 1, 32, 8>}, {transform_indices = @transform_2, window_bounds = array<i64: 1, 8, 32>}, {pipeline_mode = #tpu.pipeline_mode<synchronous>, transform_indices = @transform_3, window_bounds = array<i64: 32, 32>}, {pipeline_mode = #tpu.pipeline_mode<synchronous>, transform_indices = @transform_4, window_bounds = array<i64: 1, 32>}, {pipeline_mode = #tpu.pipeline_mode<synchronous>, transform_indices = @transform_5, window_bounds = array<i64: 2, 96, 64>}, {pipeline_mode = #tpu.pipeline_mode<synchronous>, transform_indices = @transform_6, window_bounds = array<i64: 2, 1, 64>}, {pipeline_mode = #tpu.pipeline_mode<synchronous>, transform_indices = @transform_7, window_bounds = array<i64: 2, 32, 32>}, {pipeline_mode = #tpu.pipeline_mode<synchronous>, transform_indices = @transform_8, window_bounds = array<i64: 2, 1, 32>}, {pipeline_mode = #tpu.pipeline_mode<synchronous>, transform_indices = @transform_9, window_bounds = array<i64: 2, 32, 32>}, {pipeline_mode = #tpu.pipeline_mode<synchronous>, transform_indices = @transform_10, window_bounds = array<i64: 2, 1, 32>}, {pipeline_mode = #tpu.pipeline_mode<synchronous>, transform_indices = @transform_11, window_bounds = array<i64: 32, 32>}, {pipeline_mode = #tpu.pipeline_mode<synchronous>, transform_indices = @transform_12, window_bounds = array<i64: 1, 32>}, {pipeline_mode = #tpu.pipeline_mode<synchronous>, transform_indices = @transform_13, window_bounds = array<i64: 32, 128>}, {pipeline_mode = #tpu.pipeline_mode<synchronous>, transform_indices = @transform_14, window_bounds = array<i64: 1, 128>}, {transform_indices = @transform_15, window_bounds = array<i64: 1, 8, 128>}, {transform_indices = @transform_16, window_bounds = array<i64: 1, 8, 8>}]} {
    %c0 = arith.constant 0 : index
    %c0_0 = arith.constant 0 : index
    %c0_1 = arith.constant 0 : index
    %0 = vector.load %arg1[%c0, %c0_0, %c0_1] : memref<1x8x32xf32, #tpu.memory_space<vmem>>, vector<1x8x32xf32>
    %1 = vector.shape_cast %0 : vector<1x8x32xf32> to vector<8x32xf32>
    %c0_2 = arith.constant 0 : index
    %c0_3 = arith.constant 0 : index
    %c0_4 = arith.constant 0 : index
    %2 = vector.load %arg2[%c0_2, %c0_3, %c0_4] : memref<1x32x8xf32, #tpu.memory_space<vmem>>, vector<1x32x8xf32>
    %3 = vector.shape_cast %2 : vector<1x32x8xf32> to vector<32x8xf32>
    %c0_5 = arith.constant 0 : index
    %c0_6 = arith.constant 0 : index
    %c0_7 = arith.constant 0 : index
    %4 = vector.load %arg3[%c0_5, %c0_6, %c0_7] : memref<1x8x32xf32, #tpu.memory_space<vmem>>, vector<1x8x32xf32>
    %5 = vector.shape_cast %4 : vector<1x8x32xf32> to vector<8x32xf32>
    %c0_8 = arith.constant 0 : index
    %c0_9 = arith.constant 0 : index
    %6 = vector.load %arg4[%c0_8, %c0_9] : memref<32x32xf32, #tpu.memory_space<vmem>>, vector<32x32xf32>
    %cst = arith.constant dense<0.000000e+00> : vector<8x32xf32>
    %7 = tpu.matmul %1, %6, %cst {dimension_numbers = #tpu.dot_dimension_numbers<[1], [0], [0], [1], [0, 0, 1, 1], [], []>} : vector<8x32xf32>, vector<32x32xf32>, vector<8x32xf32> -> vector<8x32xf32>
    %c0_10 = arith.constant 0 : index
    %c0_11 = arith.constant 0 : index
    %8 = vector.load %arg5[%c0_10, %c0_11] : memref<1x32xf32, #tpu.memory_space<vmem>>, vector<1x32xf32>
    %9 = vector.broadcast %8 : vector<1x32xf32> to vector<8x32xf32>
    %10 = arith.addf %7, %9 : vector<8x32xf32>
    %cst_12 = arith.constant 1.000000e+00 : f32
    %11 = vector.broadcast %cst_12 : f32 to vector<2x32xf32>
    %12 = tpu.concatenate %11, %10 in 0 : vector<2x32xf32>, vector<8x32xf32> -> vector<10x32xf32>
    %13 = vector.extract_strided_slice %12 {offsets = [0, 0], sizes = [8, 32], strides = [1, 1]} : vector<10x32xf32> to vector<8x32xf32>
    %14 = vector.extract_strided_slice %12 {offsets = [1, 0], sizes = [8, 32], strides = [1, 1]} : vector<10x32xf32> to vector<8x32xf32>
    %15 = vector.extract_strided_slice %12 {offsets = [2, 0], sizes = [8, 32], strides = [1, 1]} : vector<10x32xf32> to vector<8x32xf32>
    %16 = tpu.concatenate %13, %14, %15 in 1 : vector<8x32xf32>, vector<8x32xf32>, vector<8x32xf32> -> vector<8x96xf32>
    %c0_13 = arith.constant 0 : index
    %c0_14 = arith.constant 0 : index
    %c0_15 = arith.constant 0 : index
    %17 = vector.load %arg6[%c0_13, %c0_14, %c0_15] : memref<2x96x64xf32, #tpu.memory_space<vmem>>, vector<1x96x64xf32>
    %18 = vector.shape_cast %17 : vector<1x96x64xf32> to vector<96x64xf32>
    %cst_16 = arith.constant dense<0.000000e+00> : vector<8x64xf32>
    %19 = tpu.matmul %16, %18, %cst_16 {dimension_numbers = #tpu.dot_dimension_numbers<[1], [0], [0], [1], [0, 0, 1, 1], [], []>} : vector<8x96xf32>, vector<96x64xf32>, vector<8x64xf32> -> vector<8x64xf32>
    %c0_17 = arith.constant 0 : index
    %c0_18 = arith.constant 0 : index
    %c0_19 = arith.constant 0 : index
    %20 = vector.load %arg7[%c0_17, %c0_18, %c0_19] : memref<2x1x64xf32, #tpu.memory_space<vmem>>, vector<1x1x64xf32>
    %21 = vector.shape_cast %20 : vector<1x1x64xf32> to vector<1x64xf32>
    %22 = vector.broadcast %21 : vector<1x64xf32> to vector<8x64xf32>
    %23 = arith.addf %19, %22 : vector<8x64xf32>
    %24 = vector.extract_strided_slice %23 {offsets = [0, 0], sizes = [8, 32], strides = [1, 1]} : vector<8x64xf32> to vector<8x32xf32>
    %25 = vector.extract_strided_slice %23 {offsets = [0, 32], sizes = [8, 32], strides = [1, 1]} : vector<8x64xf32> to vector<8x32xf32>
    %26 = arith.negf %25 : vector<8x32xf32>
    %27 = math.exp %26 : vector<8x32xf32>
    %cst_20 = arith.constant 1.000000e+00 : f32
    %28 = vector.broadcast %cst_20 : f32 to vector<8x32xf32>
    %29 = arith.addf %28, %27 : vector<8x32xf32>
    %30 = arith.divf %28, %29 : vector<8x32xf32>
    %31 = arith.mulf %24, %30 : vector<8x32xf32>
    %c0_21 = arith.constant 0 : index
    %c0_22 = arith.constant 0 : index
    %c0_23 = arith.constant 0 : index
    %32 = vector.load %arg8[%c0_21, %c0_22, %c0_23] : memref<2x32x32xf32, #tpu.memory_space<vmem>>, vector<1x32x32xf32>
    %33 = vector.shape_cast %32 : vector<1x32x32xf32> to vector<32x32xf32>
    %cst_24 = arith.constant dense<0.000000e+00> : vector<8x32xf32>
    %34 = tpu.matmul %31, %33, %cst_24 {dimension_numbers = #tpu.dot_dimension_numbers<[1], [0], [0], [1], [0, 0, 1, 1], [], []>} : vector<8x32xf32>, vector<32x32xf32>, vector<8x32xf32> -> vector<8x32xf32>
    %c0_25 = arith.constant 0 : index
    %c0_26 = arith.constant 0 : index
    %c0_27 = arith.constant 0 : index
    %35 = vector.load %arg9[%c0_25, %c0_26, %c0_27] : memref<2x1x32xf32, #tpu.memory_space<vmem>>, vector<1x1x32xf32>
    %36 = vector.shape_cast %35 : vector<1x1x32xf32> to vector<1x32xf32>
    %37 = vector.broadcast %36 : vector<1x32xf32> to vector<8x32xf32>
    %38 = arith.addf %34, %37 : vector<8x32xf32>
    %39 = arith.addf %38, %1 : vector<8x32xf32>
    %cst_28 = arith.constant 0.707106769 : f32
    %40 = vector.broadcast %cst_28 : f32 to vector<8x32xf32>
    %41 = arith.mulf %39, %40 : vector<8x32xf32>
    %cst_29 = arith.constant dense<0.000000e+00> : vector<8x8xf32>
    %42 = tpu.matmul %41, %3, %cst_29 {dimension_numbers = #tpu.dot_dimension_numbers<[1], [0], [0], [1], [0, 0, 1, 1], [], []>} : vector<8x32xf32>, vector<32x8xf32>, vector<8x8xf32> -> vector<8x8xf32>
    %cst_30 = arith.constant dense<0xFF800000> : vector<8xf32>
    %43 = vector.multi_reduction <maximumf>, %42, %cst_30 [1] : vector<8x8xf32> to vector<8xf32>
    %44 = vector.shape_cast %43 : vector<8xf32> to vector<8x1xf32>
    %45 = vector.broadcast %44 : vector<8x1xf32> to vector<8x8xf32>
    %46 = arith.subf %42, %45 : vector<8x8xf32>
    %47 = math.exp %46 : vector<8x8xf32>
    %cst_31 = arith.constant dense<0.000000e+00> : vector<8xf32>
    %48 = vector.multi_reduction <add>, %47, %cst_31 [1] : vector<8x8xf32> to vector<8xf32>
    %49 = vector.shape_cast %48 : vector<8xf32> to vector<8x1xf32>
    %50 = tpu.reciprocal %49 {approx = true} : vector<8x1xf32> -> vector<8x1xf32>
    %51 = vector.broadcast %50 : vector<8x1xf32> to vector<8x8xf32>
    %52 = arith.mulf %47, %51 : vector<8x8xf32>
    %cst_32 = arith.constant dense<0.000000e+00> : vector<8x32xf32>
    %53 = tpu.matmul %52, %5, %cst_32 {dimension_numbers = #tpu.dot_dimension_numbers<[1], [0], [0], [1], [0, 0, 1, 1], [], []>} : vector<8x8xf32>, vector<8x32xf32>, vector<8x32xf32> -> vector<8x32xf32>
    %c0_33 = arith.constant 0 : index
    %c0_34 = arith.constant 0 : index
    %c0_35 = arith.constant 0 : index
    %54 = vector.load %arg10[%c0_33, %c0_34, %c0_35] : memref<2x32x32xf32, #tpu.memory_space<vmem>>, vector<1x32x32xf32>
    %55 = vector.shape_cast %54 : vector<1x32x32xf32> to vector<32x32xf32>
    %cst_36 = arith.constant dense<0.000000e+00> : vector<8x32xf32>
    %56 = tpu.matmul %53, %55, %cst_36 {dimension_numbers = #tpu.dot_dimension_numbers<[1], [0], [0], [1], [0, 0, 1, 1], [], []>} : vector<8x32xf32>, vector<32x32xf32>, vector<8x32xf32> -> vector<8x32xf32>
    %c0_37 = arith.constant 0 : index
    %c0_38 = arith.constant 0 : index
    %c0_39 = arith.constant 0 : index
    %57 = vector.load %arg11[%c0_37, %c0_38, %c0_39] : memref<2x1x32xf32, #tpu.memory_space<vmem>>, vector<1x1x32xf32>
    %58 = vector.shape_cast %57 : vector<1x1x32xf32> to vector<1x32xf32>
    %59 = vector.broadcast %58 : vector<1x32xf32> to vector<8x32xf32>
    %60 = arith.addf %56, %59 : vector<8x32xf32>
    %61 = arith.addf %31, %60 : vector<8x32xf32>
    %cst_40 = arith.constant 0.707106769 : f32
    %62 = vector.broadcast %cst_40 : f32 to vector<8x32xf32>
    %63 = arith.mulf %61, %62 : vector<8x32xf32>
    %64 = arith.addf %63, %10 : vector<8x32xf32>
    %cst_41 = arith.constant 0.707106769 : f32
    %65 = vector.broadcast %cst_41 : f32 to vector<8x32xf32>
    %66 = arith.mulf %64, %65 : vector<8x32xf32>
    %cst_42 = arith.constant 1.000000e+00 : f32
    %67 = vector.broadcast %cst_42 : f32 to vector<2x32xf32>
    %68 = tpu.concatenate %67, %66 in 0 : vector<2x32xf32>, vector<8x32xf32> -> vector<10x32xf32>
    %69 = vector.extract_strided_slice %68 {offsets = [0, 0], sizes = [8, 32], strides = [1, 1]} : vector<10x32xf32> to vector<8x32xf32>
    %70 = vector.extract_strided_slice %68 {offsets = [1, 0], sizes = [8, 32], strides = [1, 1]} : vector<10x32xf32> to vector<8x32xf32>
    %71 = vector.extract_strided_slice %68 {offsets = [2, 0], sizes = [8, 32], strides = [1, 1]} : vector<10x32xf32> to vector<8x32xf32>
    %72 = tpu.concatenate %69, %70, %71 in 1 : vector<8x32xf32>, vector<8x32xf32>, vector<8x32xf32> -> vector<8x96xf32>
    %c1 = arith.constant 1 : index
    %c0_43 = arith.constant 0 : index
    %c0_44 = arith.constant 0 : index
    %73 = vector.load %arg6[%c1, %c0_43, %c0_44] : memref<2x96x64xf32, #tpu.memory_space<vmem>>, vector<1x96x64xf32>
    %74 = vector.shape_cast %73 : vector<1x96x64xf32> to vector<96x64xf32>
    %cst_45 = arith.constant dense<0.000000e+00> : vector<8x64xf32>
    %75 = tpu.matmul %72, %74, %cst_45 {dimension_numbers = #tpu.dot_dimension_numbers<[1], [0], [0], [1], [0, 0, 1, 1], [], []>} : vector<8x96xf32>, vector<96x64xf32>, vector<8x64xf32> -> vector<8x64xf32>
    %c1_46 = arith.constant 1 : index
    %c0_47 = arith.constant 0 : index
    %c0_48 = arith.constant 0 : index
    %76 = vector.load %arg7[%c1_46, %c0_47, %c0_48] : memref<2x1x64xf32, #tpu.memory_space<vmem>>, vector<1x1x64xf32>
    %77 = vector.shape_cast %76 : vector<1x1x64xf32> to vector<1x64xf32>
    %78 = vector.broadcast %77 : vector<1x64xf32> to vector<8x64xf32>
    %79 = arith.addf %75, %78 : vector<8x64xf32>
    %80 = vector.extract_strided_slice %79 {offsets = [0, 0], sizes = [8, 32], strides = [1, 1]} : vector<8x64xf32> to vector<8x32xf32>
    %81 = vector.extract_strided_slice %79 {offsets = [0, 32], sizes = [8, 32], strides = [1, 1]} : vector<8x64xf32> to vector<8x32xf32>
    %82 = arith.negf %81 : vector<8x32xf32>
    %83 = math.exp %82 : vector<8x32xf32>
    %cst_49 = arith.constant 1.000000e+00 : f32
    %84 = vector.broadcast %cst_49 : f32 to vector<8x32xf32>
    %85 = arith.addf %84, %83 : vector<8x32xf32>
    %86 = arith.divf %84, %85 : vector<8x32xf32>
    %87 = arith.mulf %80, %86 : vector<8x32xf32>
    %c1_50 = arith.constant 1 : index
    %c0_51 = arith.constant 0 : index
    %c0_52 = arith.constant 0 : index
    %88 = vector.load %arg8[%c1_50, %c0_51, %c0_52] : memref<2x32x32xf32, #tpu.memory_space<vmem>>, vector<1x32x32xf32>
    %89 = vector.shape_cast %88 : vector<1x32x32xf32> to vector<32x32xf32>
    %cst_53 = arith.constant dense<0.000000e+00> : vector<8x32xf32>
    %90 = tpu.matmul %87, %89, %cst_53 {dimension_numbers = #tpu.dot_dimension_numbers<[1], [0], [0], [1], [0, 0, 1, 1], [], []>} : vector<8x32xf32>, vector<32x32xf32>, vector<8x32xf32> -> vector<8x32xf32>
    %c1_54 = arith.constant 1 : index
    %c0_55 = arith.constant 0 : index
    %c0_56 = arith.constant 0 : index
    %91 = vector.load %arg9[%c1_54, %c0_55, %c0_56] : memref<2x1x32xf32, #tpu.memory_space<vmem>>, vector<1x1x32xf32>
    %92 = vector.shape_cast %91 : vector<1x1x32xf32> to vector<1x32xf32>
    %93 = vector.broadcast %92 : vector<1x32xf32> to vector<8x32xf32>
    %94 = arith.addf %90, %93 : vector<8x32xf32>
    %95 = arith.addf %94, %1 : vector<8x32xf32>
    %cst_57 = arith.constant 0.707106769 : f32
    %96 = vector.broadcast %cst_57 : f32 to vector<8x32xf32>
    %97 = arith.mulf %95, %96 : vector<8x32xf32>
    %cst_58 = arith.constant dense<0.000000e+00> : vector<8x8xf32>
    %98 = tpu.matmul %97, %3, %cst_58 {dimension_numbers = #tpu.dot_dimension_numbers<[1], [0], [0], [1], [0, 0, 1, 1], [], []>} : vector<8x32xf32>, vector<32x8xf32>, vector<8x8xf32> -> vector<8x8xf32>
    %cst_59 = arith.constant dense<0xFF800000> : vector<8xf32>
    %99 = vector.multi_reduction <maximumf>, %98, %cst_59 [1] : vector<8x8xf32> to vector<8xf32>
    %100 = vector.shape_cast %99 : vector<8xf32> to vector<8x1xf32>
    %101 = vector.broadcast %100 : vector<8x1xf32> to vector<8x8xf32>
    %102 = arith.subf %98, %101 : vector<8x8xf32>
    %103 = math.exp %102 : vector<8x8xf32>
    %cst_60 = arith.constant dense<0.000000e+00> : vector<8xf32>
    %104 = vector.multi_reduction <add>, %103, %cst_60 [1] : vector<8x8xf32> to vector<8xf32>
    %105 = vector.shape_cast %104 : vector<8xf32> to vector<8x1xf32>
    %106 = tpu.reciprocal %105 {approx = true} : vector<8x1xf32> -> vector<8x1xf32>
    %107 = vector.broadcast %106 : vector<8x1xf32> to vector<8x8xf32>
    %108 = arith.mulf %103, %107 : vector<8x8xf32>
    %cst_61 = arith.constant dense<0.000000e+00> : vector<8x32xf32>
    %109 = tpu.matmul %108, %5, %cst_61 {dimension_numbers = #tpu.dot_dimension_numbers<[1], [0], [0], [1], [0, 0, 1, 1], [], []>} : vector<8x8xf32>, vector<8x32xf32>, vector<8x32xf32> -> vector<8x32xf32>
    %c1_62 = arith.constant 1 : index
    %c0_63 = arith.constant 0 : index
    %c0_64 = arith.constant 0 : index
    %110 = vector.load %arg10[%c1_62, %c0_63, %c0_64] : memref<2x32x32xf32, #tpu.memory_space<vmem>>, vector<1x32x32xf32>
    %111 = vector.shape_cast %110 : vector<1x32x32xf32> to vector<32x32xf32>
    %cst_65 = arith.constant dense<0.000000e+00> : vector<8x32xf32>
    %112 = tpu.matmul %109, %111, %cst_65 {dimension_numbers = #tpu.dot_dimension_numbers<[1], [0], [0], [1], [0, 0, 1, 1], [], []>} : vector<8x32xf32>, vector<32x32xf32>, vector<8x32xf32> -> vector<8x32xf32>
    %c1_66 = arith.constant 1 : index
    %c0_67 = arith.constant 0 : index
    %c0_68 = arith.constant 0 : index
    %113 = vector.load %arg11[%c1_66, %c0_67, %c0_68] : memref<2x1x32xf32, #tpu.memory_space<vmem>>, vector<1x1x32xf32>
    %114 = vector.shape_cast %113 : vector<1x1x32xf32> to vector<1x32xf32>
    %115 = vector.broadcast %114 : vector<1x32xf32> to vector<8x32xf32>
    %116 = arith.addf %112, %115 : vector<8x32xf32>
    %117 = arith.addf %87, %116 : vector<8x32xf32>
    %cst_69 = arith.constant 0.707106769 : f32
    %118 = vector.broadcast %cst_69 : f32 to vector<8x32xf32>
    %119 = arith.mulf %117, %118 : vector<8x32xf32>
    %120 = arith.addf %119, %66 : vector<8x32xf32>
    %cst_70 = arith.constant 0.707106769 : f32
    %121 = vector.broadcast %cst_70 : f32 to vector<8x32xf32>
    %122 = arith.mulf %120, %121 : vector<8x32xf32>
    %c0_71 = arith.constant 0 : index
    %c0_72 = arith.constant 0 : index
    %123 = vector.load %arg12[%c0_71, %c0_72] : memref<32x32xf32, #tpu.memory_space<vmem>>, vector<32x32xf32>
    %cst_73 = arith.constant dense<0.000000e+00> : vector<8x32xf32>
    %124 = tpu.matmul %122, %123, %cst_73 {dimension_numbers = #tpu.dot_dimension_numbers<[1], [0], [0], [1], [0, 0, 1, 1], [], []>} : vector<8x32xf32>, vector<32x32xf32>, vector<8x32xf32> -> vector<8x32xf32>
    %c0_74 = arith.constant 0 : index
    %c0_75 = arith.constant 0 : index
    %125 = vector.load %arg13[%c0_74, %c0_75] : memref<1x32xf32, #tpu.memory_space<vmem>>, vector<1x32xf32>
    %126 = vector.broadcast %125 : vector<1x32xf32> to vector<8x32xf32>
    %127 = arith.addf %124, %126 : vector<8x32xf32>
    %c0_76 = arith.constant 0 : index
    %c0_77 = arith.constant 0 : index
    %128 = vector.load %arg14[%c0_76, %c0_77] : memref<32x128xf32, #tpu.memory_space<vmem>>, vector<32x128xf32>
    %cst_78 = arith.constant dense<0.000000e+00> : vector<8x128xf32>
    %129 = tpu.matmul %127, %128, %cst_78 {dimension_numbers = #tpu.dot_dimension_numbers<[1], [0], [0], [1], [0, 0, 1, 1], [], []>} : vector<8x32xf32>, vector<32x128xf32>, vector<8x128xf32> -> vector<8x128xf32>
    %c0_79 = arith.constant 0 : index
    %c0_80 = arith.constant 0 : index
    %130 = vector.load %arg15[%c0_79, %c0_80] : memref<1x128xf32, #tpu.memory_space<vmem>>, vector<1x128xf32>
    %131 = vector.broadcast %130 : vector<1x128xf32> to vector<8x128xf32>
    %132 = arith.addf %129, %131 : vector<8x128xf32>
    %c0_81 = arith.constant 0 : index
    %c0_82 = arith.constant 0 : index
    %c0_83 = arith.constant 0 : index
    %133 = vector.load %arg16[%c0_81, %c0_82, %c0_83] : memref<1x8x128xf32, #tpu.memory_space<vmem>>, vector<1x8x128xf32>
    %134 = vector.shape_cast %133 : vector<1x8x128xf32> to vector<8x128xf32>
    %135 = vector.shape_cast %132 : vector<8x128xf32> to vector<1x8x128xf32>
    tpu.vector_store %arg16[%c0_81, %c0_82, %c0_83], %135 {strides = array<i32>} : memref<1x8x128xf32, #tpu.memory_space<vmem>>, vector<1x8x128xf32>,
    %c0_84 = arith.constant 0 : index
    %c0_85 = arith.constant 0 : index
    %c0_86 = arith.constant 0 : index
    %136 = vector.load %arg17[%c0_84, %c0_85, %c0_86] : memref<1x8x8xf32, #tpu.memory_space<vmem>>, vector<1x8x8xf32>
    %137 = vector.shape_cast %136 : vector<1x8x8xf32> to vector<8x8xf32>
    %138 = vector.shape_cast %108 : vector<8x8xf32> to vector<1x8x8xf32>
    tpu.vector_store %arg17[%c0_84, %c0_85, %c0_86], %138 {strides = array<i32>} : memref<1x8x8xf32, #tpu.memory_space<vmem>>, vector<1x8x8xf32>,
    return
  }
  func.func @transform_0(%arg0: i32) -> (i32, i32, i32) {
    %c0_i32 = arith.constant 0 : i32
    %c0_i32_0 = arith.constant 0 : i32
    %c0_i32_1 = arith.constant 0 : i32
    return %arg0, %c0_i32, %c0_i32_0 : i32, i32, i32
  }
  func.func @transform_1(%arg0: i32) -> (i32, i32, i32) {
    %c0_i32 = arith.constant 0 : i32
    %c0_i32_0 = arith.constant 0 : i32
    %c0_i32_1 = arith.constant 0 : i32
    return %arg0, %c0_i32, %c0_i32_0 : i32, i32, i32
  }
  func.func @transform_2(%arg0: i32) -> (i32, i32, i32) {
    %c0_i32 = arith.constant 0 : i32
    %c0_i32_0 = arith.constant 0 : i32
    %c0_i32_1 = arith.constant 0 : i32
    return %arg0, %c0_i32, %c0_i32_0 : i32, i32, i32
  }
  func.func @transform_3(%arg0: i32) -> (i32, i32) {
    %c0_i32 = arith.constant 0 : i32
    %c0_i32_0 = arith.constant 0 : i32
    %c0_i32_1 = arith.constant 0 : i32
    return %c0_i32, %c0_i32_0 : i32, i32
  }
  func.func @transform_4(%arg0: i32) -> (i32, i32) {
    %c0_i32 = arith.constant 0 : i32
    %c0_i32_0 = arith.constant 0 : i32
    %c0_i32_1 = arith.constant 0 : i32
    return %c0_i32, %c0_i32_0 : i32, i32
  }
  func.func @transform_5(%arg0: i32) -> (i32, i32, i32) {
    %c0_i32 = arith.constant 0 : i32
    %c0_i32_0 = arith.constant 0 : i32
    %c0_i32_1 = arith.constant 0 : i32
    %c0_i32_2 = arith.constant 0 : i32
    return %c0_i32, %c0_i32_0, %c0_i32_1 : i32, i32, i32
  }
  func.func @transform_6(%arg0: i32) -> (i32, i32, i32) {
    %c0_i32 = arith.constant 0 : i32
    %c0_i32_0 = arith.constant 0 : i32
    %c0_i32_1 = arith.constant 0 : i32
    %c0_i32_2 = arith.constant 0 : i32
    return %c0_i32, %c0_i32_0, %c0_i32_1 : i32, i32, i32
  }
  func.func @transform_7(%arg0: i32) -> (i32, i32, i32) {
    %c0_i32 = arith.constant 0 : i32
    %c0_i32_0 = arith.constant 0 : i32
    %c0_i32_1 = arith.constant 0 : i32
    %c0_i32_2 = arith.constant 0 : i32
    return %c0_i32, %c0_i32_0, %c0_i32_1 : i32, i32, i32
  }
  func.func @transform_8(%arg0: i32) -> (i32, i32, i32) {
    %c0_i32 = arith.constant 0 : i32
    %c0_i32_0 = arith.constant 0 : i32
    %c0_i32_1 = arith.constant 0 : i32
    %c0_i32_2 = arith.constant 0 : i32
    return %c0_i32, %c0_i32_0, %c0_i32_1 : i32, i32, i32
  }
  func.func @transform_9(%arg0: i32) -> (i32, i32, i32) {
    %c0_i32 = arith.constant 0 : i32
    %c0_i32_0 = arith.constant 0 : i32
    %c0_i32_1 = arith.constant 0 : i32
    %c0_i32_2 = arith.constant 0 : i32
    return %c0_i32, %c0_i32_0, %c0_i32_1 : i32, i32, i32
  }
  func.func @transform_10(%arg0: i32) -> (i32, i32, i32) {
    %c0_i32 = arith.constant 0 : i32
    %c0_i32_0 = arith.constant 0 : i32
    %c0_i32_1 = arith.constant 0 : i32
    %c0_i32_2 = arith.constant 0 : i32
    return %c0_i32, %c0_i32_0, %c0_i32_1 : i32, i32, i32
  }
  func.func @transform_11(%arg0: i32) -> (i32, i32) {
    %c0_i32 = arith.constant 0 : i32
    %c0_i32_0 = arith.constant 0 : i32
    %c0_i32_1 = arith.constant 0 : i32
    return %c0_i32, %c0_i32_0 : i32, i32
  }
  func.func @transform_12(%arg0: i32) -> (i32, i32) {
    %c0_i32 = arith.constant 0 : i32
    %c0_i32_0 = arith.constant 0 : i32
    %c0_i32_1 = arith.constant 0 : i32
    return %c0_i32, %c0_i32_0 : i32, i32
  }
  func.func @transform_13(%arg0: i32) -> (i32, i32) {
    %c0_i32 = arith.constant 0 : i32
    %c0_i32_0 = arith.constant 0 : i32
    %c0_i32_1 = arith.constant 0 : i32
    return %c0_i32, %c0_i32_0 : i32, i32
  }
  func.func @transform_14(%arg0: i32) -> (i32, i32) {
    %c0_i32 = arith.constant 0 : i32
    %c0_i32_0 = arith.constant 0 : i32
    %c0_i32_1 = arith.constant 0 : i32
    return %c0_i32, %c0_i32_0 : i32, i32
  }
  func.func @transform_15(%arg0: i32) -> (i32, i32, i32) {
    %c0_i32 = arith.constant 0 : i32
    %c0_i32_0 = arith.constant 0 : i32
    %c0_i32_1 = arith.constant 0 : i32
    return %arg0, %c0_i32, %c0_i32_0 : i32, i32, i32
  }
  func.func @transform_16(%arg0: i32) -> (i32, i32, i32) {
    %c0_i32 = arith.constant 0 : i32
    %c0_i32_0 = arith.constant 0 : i32
    %c0_i32_1 = arith.constant 0 : i32
    return %arg0, %c0_i32, %c0_i32_0 : i32, i32, i32
  }
}

</mosaic_0001>

<llo_original>
// kernel: decoder_cnn_forward.1
$region0: #{decoder_cnn_forward.1}
  #allocation0 [shape = 'u32[]', space=smem, size = 0x4, offset = 0x4, fixed_abs, tag = 'smem constant byte address 0x4 - core index']
  #allocation1 [shape = 'u32[144,128]{1,0:T(1,128)}', space=vmem, size = 0x12000, scoped, tag = 'internal scratch']
  %s0 = inlined_call_operand.vmem [shape: f32[2,8,32], index: 0, kind: input, shape index: {}]
  %s1 = inlined_call_operand.vmem [shape: f32[2,32,8], index: 1, kind: input, shape index: {}]
  %s2 = inlined_call_operand.vmem [shape: f32[2,8,32], index: 2, kind: input, shape index: {}]
  %s3 = inlined_call_operand.vmem [shape: f32[32,32], index: 3, kind: input, shape index: {}]
  %s4 = inlined_call_operand.vmem [shape: f32[1,32], index: 4, kind: input, shape index: {}]
  %s5 = inlined_call_operand.vmem [shape: f32[2,96,64], index: 5, kind: input, shape index: {}]
  %s6 = inlined_call_operand.vmem [shape: f32[2,1,64], index: 6, kind: input, shape index: {}]
  %s7 = inlined_call_operand.vmem [shape: f32[2,32,32], index: 7, kind: input, shape index: {}]
  %s8 = inlined_call_operand.vmem [shape: f32[2,1,32], index: 8, kind: input, shape index: {}]
  %s9 = inlined_call_operand.vmem [shape: f32[2,32,32], index: 9, kind: input, shape index: {}]
  %s10 = inlined_call_operand.vmem [shape: f32[2,1,32], index: 10, kind: input, shape index: {}]
  %s11 = inlined_call_operand.vmem [shape: f32[32,32], index: 11, kind: input, shape index: {}]
  %s12 = inlined_call_operand.vmem [shape: f32[1,32], index: 12, kind: input, shape index: {}]
  %s13 = inlined_call_operand.vmem [shape: f32[32,128], index: 13, kind: input, shape index: {}]
  %s14 = inlined_call_operand.vmem [shape: f32[1,128], index: 14, kind: input, shape index: {}]
  %s15 = inlined_call_operand.hbm [shape: f32[2,8,128], index: 15, kind: output, shape index: {0}]
  %s16 = inlined_call_operand.hbm [shape: f32[2,8,8], index: 16, kind: output, shape index: {1}]
  %17 = xla_tuple %s15, %s16
  %s18 = sld [smem:[#allocation0]]
  $region101: #{decoder_cnn_forward.1} parent=0
    _
  %s20 = ssub.s32 1, %s18
  %s21 = scalar_select 0, %s20, %s18
  $region1: #{decoder_cnn_forward.1} parent=0
    #allocation2 [shape = 'u8[8192]{0}', space=vmem, size = 0x2000, scoped, tag = 'output window, operand 0']
    #allocation3 [shape = 's32[2]{0}', space=sflag, size = 0x8, scoped, tag = 'scoped memory for decoder_cnn_forward.1']
    #allocation4 [shape = 'u8[8192]{0}', space=vmem, size = 0x2000, scoped, tag = 'output window, operand 1']
    #allocation5 [shape = 's32[2]{0}', space=sflag, size = 0x8, scoped, tag = 'scoped memory for decoder_cnn_forward.1']
    %22 = vsyncpa [#allocation3], 0
    %s23 = scalar_lea.sflag [#allocation3], 1
    %24 = vsyncpa %s23, 0
    %25 = vsyncpa [#allocation5], 0
    %s26 = scalar_lea.sflag [#allocation5], 1
    %27 = vsyncpa %s26, 0
    loop: start=0, step=1, limit=4
    $region2: #{decoder_cnn_forward.1} parent=1 // loop_pre_header
      _
    $region3: #{decoder_cnn_forward.1} parent=1 // loop_header
      %s29 = sphi 0, %s33
      %p30 = scmp.ge.s32.totalorder %s29, 4
      %s39 = sphi 0, %s41
      %s42 = sphi 0, %s39
      %s43 = sphi 0, %s42
      %s59 = sphi 0, %s43
      %s65 = sphi 0, %s67
      %s68 = sphi 0, %s65
      %s69 = sphi 0, %s68
      %s85 = sphi 0, %s69
      %s91 = sphi 0, %s93
      %s94 = sphi 0, %s91
      %s95 = sphi 0, %s94
      %s111 = sphi 0, %s95
      %s115 = sphi 0, %s115
      %s117 = sphi 0, %s115
      %s118 = sphi 0, %s117
      %s132 = sphi 0, %s118
      %s136 = sphi 0, %s136
      %s138 = sphi 0, %s136
      %s139 = sphi 0, %s138
      %s153 = sphi 0, %s139
      %s157 = sphi 0, %s157
      %s159 = sphi 0, %s157
      %s160 = sphi 0, %s159
      %s174 = sphi 0, %s160
      %s178 = sphi 0, %s178
      %s180 = sphi 0, %s178
      %s181 = sphi 0, %s180
      %s195 = sphi 0, %s181
      %s199 = sphi 0, %s199
      %s201 = sphi 0, %s199
      %s202 = sphi 0, %s201
      %s216 = sphi 0, %s202
      %s220 = sphi 0, %s220
      %s222 = sphi 0, %s220
      %s223 = sphi 0, %s222
      %s237 = sphi 0, %s223
      %s241 = sphi 0, %s241
      %s243 = sphi 0, %s241
      %s244 = sphi 0, %s243
      %s258 = sphi 0, %s244
      %s262 = sphi 0, %s262
      %s264 = sphi 0, %s262
      %s265 = sphi 0, %s264
      %s279 = sphi 0, %s265
      %s283 = sphi 0, %s283
      %s285 = sphi 0, %s283
      %s286 = sphi 0, %s285
      %s300 = sphi 0, %s286
      %s304 = sphi 0, %s304
      %s306 = sphi 0, %s304
      %s307 = sphi 0, %s306
      %s321 = sphi 0, %s307
      %s325 = sphi 0, %s325
      %s327 = sphi 0, %s325
      %s328 = sphi 0, %s327
      %s342 = sphi 0, %s328
      %s346 = sphi 0, %s346
      %s348 = sphi 0, %s346
      %s349 = sphi 0, %s348
      %s363 = sphi 0, %s349
      %s369 = sphi 0, %s371
      %s372 = sphi 0, %s369
      %s373 = sphi 0, %s372
      %s389 = sphi 0, %s373
      %s395 = sphi 0, %s397
      %s398 = sphi 0, %s395
      %s399 = sphi 0, %s398
      %s415 = sphi 0, %s399
    $region4: #{decoder_cnn_forward.1} parent=1 // loop_header_branch
      %32 = sbr.rel (%p30) target = $region8
    $region5: #{decoder_cnn_forward.1} parent=1 // loop_body
      %s34 = ssub.s32 %s29, 1
      %s35 = ssub.s32 %s29, 2
      %s36 = sadd.s32 %s29, 1
      %s37 = ssub.s32 %s29, %s36
      %p38 = scmp.eq.s32.totalorder %s37, 0
      %s40 = sadd.s32 %s39, 1
      %s41 = scalar_select %p38, %s39, %s40
      %p44 = pneg %p38
      %p45 = scmp.eq.s32.totalorder %s29, 1
      %p46 = por %p44, %p45
      %p47 = scmp.ne.s32.totalorder %s39, %s42
      %p48 = scmp.eq.s32.totalorder %s29, 0
      %p49 = por %p47, %p48
      %p50 = scmp.ne.s32.totalorder %s39, %s42
      %p51 = scmp.eq.s32.totalorder %s34, 1
      %p52 = por %p50, %p51
      %p53 = scmp.ne.s32.totalorder %s42, %s43
      %p54 = scmp.eq.s32.totalorder %s34, 0
      %p55 = por %p53, %p54
      %p56 = scmp.ne.s32.totalorder %s42, %s43
      %p57 = scmp.eq.s32.totalorder %s35, 1
      %p58 = por %p56, %p57
      %p60 = scmp.ne.s32.totalorder %s43, %s59
      %p61 = scmp.eq.s32.totalorder %s35, 0
      %p62 = por %p60, %p61
      %s63 = ssub.s32 %s29, %s36
      %p64 = scmp.eq.s32.totalorder %s63, 0
      %s66 = sadd.s32 %s65, 1
      %s67 = scalar_select %p64, %s65, %s66
      %p70 = pneg %p64
      %p71 = scmp.eq.s32.totalorder %s29, 1
      %p72 = por %p70, %p71
      %p73 = scmp.ne.s32.totalorder %s65, %s68
      %p74 = scmp.eq.s32.totalorder %s29, 0
      %p75 = por %p73, %p74
      %p76 = scmp.ne.s32.totalorder %s65, %s68
      %p77 = scmp.eq.s32.totalorder %s34, 1
      %p78 = por %p76, %p77
      %p79 = scmp.ne.s32.totalorder %s68, %s69
      %p80 = scmp.eq.s32.totalorder %s34, 0
      %p81 = por %p79, %p80
      %p82 = scmp.ne.s32.totalorder %s68, %s69
      %p83 = scmp.eq.s32.totalorder %s35, 1
      %p84 = por %p82, %p83
      %p86 = scmp.ne.s32.totalorder %s69, %s85
      %p87 = scmp.eq.s32.totalorder %s35, 0
      %p88 = por %p86, %p87
      %s89 = ssub.s32 %s29, %s36
      %p90 = scmp.eq.s32.totalorder %s89, 0
      %s92 = sadd.s32 %s91, 1
      %s93 = scalar_select %p90, %s91, %s92
      %p96 = pneg %p90
      %p97 = scmp.eq.s32.totalorder %s29, 1
      %p98 = por %p96, %p97
      %p99 = scmp.ne.s32.totalorder %s91, %s94
      %p100 = scmp.eq.s32.totalorder %s29, 0
      %p101 = por %p99, %p100
      %p102 = scmp.ne.s32.totalorder %s91, %s94
      %p103 = scmp.eq.s32.totalorder %s34, 1
      %p104 = por %p102, %p103
      %p105 = scmp.ne.s32.totalorder %s94, %s95
      %p106 = scmp.eq.s32.totalorder %s34, 0
      %p107 = por %p105, %p106
      %p108 = scmp.ne.s32.totalorder %s94, %s95
      %p109 = scmp.eq.s32.totalorder %s35, 1
      %p110 = por %p108, %p109
      %p112 = scmp.ne.s32.totalorder %s95, %s111
      %p113 = scmp.eq.s32.totalorder %s35, 0
      %p114 = por %p112, %p113
      %s116 = sadd.s32 %s115, 1
      %p119 = scmp.eq.s32.totalorder %s29, 1
      %p120 = scmp.ne.s32.totalorder %s115, %s117
      %p121 = scmp.eq.s32.totalorder %s29, 0
      %p122 = por %p120, %p121
      %p123 = scmp.ne.s32.totalorder %s115, %s117
      %p124 = scmp.eq.s32.totalorder %s34, 1
      %p125 = por %p123, %p124
      %p126 = scmp.ne.s32.totalorder %s117, %s118
      %p127 = scmp.eq.s32.totalorder %s34, 0
      %p128 = por %p126, %p127
      %p129 = scmp.ne.s32.totalorder %s117, %s118
      %p130 = scmp.eq.s32.totalorder %s35, 1
      %p131 = por %p129, %p130
      %p133 = scmp.ne.s32.totalorder %s118, %s132
      %p134 = scmp.eq.s32.totalorder %s35, 0
      %p135 = por %p133, %p134
      %s137 = sadd.s32 %s136, 1
      %p140 = scmp.eq.s32.totalorder %s29, 1
      %p141 = scmp.ne.s32.totalorder %s136, %s138
      %p142 = scmp.eq.s32.totalorder %s29, 0
      %p143 = por %p141, %p142
      %p144 = scmp.ne.s32.totalorder %s136, %s138
      %p145 = scmp.eq.s32.totalorder %s34, 1
      %p146 = por %p144, %p145
      %p147 = scmp.ne.s32.totalorder %s138, %s139
      %p148 = scmp.eq.s32.totalorder %s34, 0
      %p149 = por %p147, %p148
      %p150 = scmp.ne.s32.totalorder %s138, %s139
      %p151 = scmp.eq.s32.totalorder %s35, 1
      %p152 = por %p150, %p151
      %p154 = scmp.ne.s32.totalorder %s139, %s153
      %p155 = scmp.eq.s32.totalorder %s35, 0
      %p156 = por %p154, %p155
      %s158 = sadd.s32 %s157, 1
      %p161 = scmp.eq.s32.totalorder %s29, 1
      %p162 = scmp.ne.s32.totalorder %s157, %s159
      %p163 = scmp.eq.s32.totalorder %s29, 0
      %p164 = por %p162, %p163
      %p165 = scmp.ne.s32.totalorder %s157, %s159
      %p166 = scmp.eq.s32.totalorder %s34, 1
      %p167 = por %p165, %p166
      %p168 = scmp.ne.s32.totalorder %s159, %s160
      %p169 = scmp.eq.s32.totalorder %s34, 0
      %p170 = por %p168, %p169
      %p171 = scmp.ne.s32.totalorder %s159, %s160
      %p172 = scmp.eq.s32.totalorder %s35, 1
      %p173 = por %p171, %p172
      %p175 = scmp.ne.s32.totalorder %s160, %s174
      %p176 = scmp.eq.s32.totalorder %s35, 0
      %p177 = por %p175, %p176
      %s179 = sadd.s32 %s178, 1
      %p182 = scmp.eq.s32.totalorder %s29, 1
      %p183 = scmp.ne.s32.totalorder %s178, %s180
      %p184 = scmp.eq.s32.totalorder %s29, 0
      %p185 = por %p183, %p184
      %p186 = scmp.ne.s32.totalorder %s178, %s180
      %p187 = scmp.eq.s32.totalorder %s34, 1
      %p188 = por %p186, %p187
      %p189 = scmp.ne.s32.totalorder %s180, %s181
      %p190 = scmp.eq.s32.totalorder %s34, 0
      %p191 = por %p189, %p190
      %p192 = scmp.ne.s32.totalorder %s180, %s181
      %p193 = scmp.eq.s32.totalorder %s35, 1
      %p194 = por %p192, %p193
      %p196 = scmp.ne.s32.totalorder %s181, %s195
      %p197 = scmp.eq.s32.totalorder %s35, 0
      %p198 = por %p196, %p197
      %s200 = sadd.s32 %s199, 1
      %p203 = scmp.eq.s32.totalorder %s29, 1
      %p204 = scmp.ne.s32.totalorder %s199, %s201
      %p205 = scmp.eq.s32.totalorder %s29, 0
      %p206 = por %p204, %p205
      %p207 = scmp.ne.s32.totalorder %s199, %s201
      %p208 = scmp.eq.s32.totalorder %s34, 1
      %p209 = por %p207, %p208
      %p210 = scmp.ne.s32.totalorder %s201, %s202
      %p211 = scmp.eq.s32.totalorder %s34, 0
      %p212 = por %p210, %p211
      %p213 = scmp.ne.s32.totalorder %s201, %s202
      %p214 = scmp.eq.s32.totalorder %s35, 1
      %p215 = por %p213, %p214
      %p217 = scmp.ne.s32.totalorder %s202, %s216
      %p218 = scmp.eq.s32.totalorder %s35, 0
      %p219 = por %p217, %p218
      %s221 = sadd.s32 %s220, 1
      %p224 = scmp.eq.s32.totalorder %s29, 1
      %p225 = scmp.ne.s32.totalorder %s220, %s222
      %p226 = scmp.eq.s32.totalorder %s29, 0
      %p227 = por %p225, %p226
      %p228 = scmp.ne.s32.totalorder %s220, %s222
      %p229 = scmp.eq.s32.totalorder %s34, 1
      %p230 = por %p228, %p229
      %p231 = scmp.ne.s32.totalorder %s222, %s223
      %p232 = scmp.eq.s32.totalorder %s34, 0
      %p233 = por %p231, %p232
      %p234 = scmp.ne.s32.totalorder %s222, %s223
      %p235 = scmp.eq.s32.totalorder %s35, 1
      %p236 = por %p234, %p235
      %p238 = scmp.ne.s32.totalorder %s223, %s237
      %p239 = scmp.eq.s32.totalorder %s35, 0
      %p240 = por %p238, %p239
      %s242 = sadd.s32 %s241, 1
      %p245 = scmp.eq.s32.totalorder %s29, 1
      %p246 = scmp.ne.s32.totalorder %s241, %s243
      %p247 = scmp.eq.s32.totalorder %s29, 0
      %p248 = por %p246, %p247
      %p249 = scmp.ne.s32.totalorder %s241, %s243
      %p250 = scmp.eq.s32.totalorder %s34, 1
      %p251 = por %p249, %p250
      %p252 = scmp.ne.s32.totalorder %s243, %s244
      %p253 = scmp.eq.s32.totalorder %s34, 0
      %p254 = por %p252, %p253
      %p255 = scmp.ne.s32.totalorder %s243, %s244
      %p256 = scmp.eq.s32.totalorder %s35, 1
      %p257 = por %p255, %p256
      %p259 = scmp.ne.s32.totalorder %s244, %s258
      %p260 = scmp.eq.s32.totalorder %s35, 0
      %p261 = por %p259, %p260
      %s263 = sadd.s32 %s262, 1
      %p266 = scmp.eq.s32.totalorder %s29, 1
      %p267 = scmp.ne.s32.totalorder %s262, %s264
      %p268 = scmp.eq.s32.totalorder %s29, 0
      %p269 = por %p267, %p268
      %p270 = scmp.ne.s32.totalorder %s262, %s264
      %p271 = scmp.eq.s32.totalorder %s34, 1
      %p272 = por %p270, %p271
      %p273 = scmp.ne.s32.totalorder %s264, %s265
      %p274 = scmp.eq.s32.totalorder %s34, 0
      %p275 = por %p273, %p274
      %p276 = scmp.ne.s32.totalorder %s264, %s265
      %p277 = scmp.eq.s32.totalorder %s35, 1
      %p278 = por %p276, %p277
      %p280 = scmp.ne.s32.totalorder %s265, %s279
      %p281 = scmp.eq.s32.totalorder %s35, 0
      %p282 = por %p280, %p281
      %s284 = sadd.s32 %s283, 1
      %p287 = scmp.eq.s32.totalorder %s29, 1
      %p288 = scmp.ne.s32.totalorder %s283, %s285
      %p289 = scmp.eq.s32.totalorder %s29, 0
      %p290 = por %p288, %p289
      %p291 = scmp.ne.s32.totalorder %s283, %s285
      %p292 = scmp.eq.s32.totalorder %s34, 1
      %p293 = por %p291, %p292
      %p294 = scmp.ne.s32.totalorder %s285, %s286
      %p295 = scmp.eq.s32.totalorder %s34, 0
      %p296 = por %p294, %p295
      %p297 = scmp.ne.s32.totalorder %s285, %s286
      %p298 = scmp.eq.s32.totalorder %s35, 1
      %p299 = por %p297, %p298
      %p301 = scmp.ne.s32.totalorder %s286, %s300
      %p302 = scmp.eq.s32.totalorder %s35, 0
      %p303 = por %p301, %p302
      %s305 = sadd.s32 %s304, 1
      %p308 = scmp.eq.s32.totalorder %s29, 1
      %p309 = scmp.ne.s32.totalorder %s304, %s306
      %p310 = scmp.eq.s32.totalorder %s29, 0
      %p311 = por %p309, %p310
      %p312 = scmp.ne.s32.totalorder %s304, %s306
      %p313 = scmp.eq.s32.totalorder %s34, 1
      %p314 = por %p312, %p313
      %p315 = scmp.ne.s32.totalorder %s306, %s307
      %p316 = scmp.eq.s32.totalorder %s34, 0
      %p317 = por %p315, %p316
      %p318 = scmp.ne.s32.totalorder %s306, %s307
      %p319 = scmp.eq.s32.totalorder %s35, 1
      %p320 = por %p318, %p319
      %p322 = scmp.ne.s32.totalorder %s307, %s321
      %p323 = scmp.eq.s32.totalorder %s35, 0
      %p324 = por %p322, %p323
      %s326 = sadd.s32 %s325, 1
      %p329 = scmp.eq.s32.totalorder %s29, 1
      %p330 = scmp.ne.s32.totalorder %s325, %s327
      %p331 = scmp.eq.s32.totalorder %s29, 0
      %p332 = por %p330, %p331
      %p333 = scmp.ne.s32.totalorder %s325, %s327
      %p334 = scmp.eq.s32.totalorder %s34, 1
      %p335 = por %p333, %p334
      %p336 = scmp.ne.s32.totalorder %s327, %s328
      %p337 = scmp.eq.s32.totalorder %s34, 0
      %p338 = por %p336, %p337
      %p339 = scmp.ne.s32.totalorder %s327, %s328
      %p340 = scmp.eq.s32.totalorder %s35, 1
      %p341 = por %p339, %p340
      %p343 = scmp.ne.s32.totalorder %s328, %s342
      %p344 = scmp.eq.s32.totalorder %s35, 0
      %p345 = por %p343, %p344
      %s347 = sadd.s32 %s346, 1
      %p350 = scmp.eq.s32.totalorder %s29, 1
      %p351 = scmp.ne.s32.totalorder %s346, %s348
      %p352 = scmp.eq.s32.totalorder %s29, 0
      %p353 = por %p351, %p352
      %p354 = scmp.ne.s32.totalorder %s346, %s348
      %p355 = scmp.eq.s32.totalorder %s34, 1
      %p356 = por %p354, %p355
      %p357 = scmp.ne.s32.totalorder %s348, %s349
      %p358 = scmp.eq.s32.totalorder %s34, 0
      %p359 = por %p357, %p358
      %p360 = scmp.ne.s32.totalorder %s348, %s349
      %p361 = scmp.eq.s32.totalorder %s35, 1
      %p362 = por %p360, %p361
      %p364 = scmp.ne.s32.totalorder %s349, %s363
      %p365 = scmp.eq.s32.totalorder %s35, 0
      %p366 = por %p364, %p365
      %s367 = ssub.s32 %s29, %s36
      %p368 = scmp.eq.s32.totalorder %s367, 0
      %s370 = sadd.s32 %s369, 1
      %s371 = scalar_select %p368, %s369, %s370
      %p374 = pneg %p368
      %p375 = scmp.eq.s32.totalorder %s29, 1
      %p376 = por %p374, %p375
      %p377 = scmp.ne.s32.totalorder %s369, %s372
      %p378 = scmp.eq.s32.totalorder %s29, 0
      %p379 = por %p377, %p378
      %p380 = scmp.ne.s32.totalorder %s369, %s372
      %p381 = scmp.eq.s32.totalorder %s34, 1
      %p382 = por %p380, %p381
      %p383 = scmp.ne.s32.totalorder %s372, %s373
      %p384 = scmp.eq.s32.totalorder %s34, 0
      %p385 = por %p383, %p384
      %p386 = scmp.ne.s32.totalorder %s372, %s373
      %p387 = scmp.eq.s32.totalorder %s35, 1
      %p388 = por %p386, %p387
      %p390 = scmp.ne.s32.totalorder %s373, %s389
      %p391 = scmp.eq.s32.totalorder %s35, 0
      %p392 = por %p390, %p391
      %s393 = ssub.s32 %s29, %s36
      %p394 = scmp.eq.s32.totalorder %s393, 0
      %s396 = sadd.s32 %s395, 1
      %s397 = scalar_select %p394, %s395, %s396
      %p400 = pneg %p394
      %p401 = scmp.eq.s32.totalorder %s29, 1
      %p402 = por %p400, %p401
      %p403 = scmp.ne.s32.totalorder %s395, %s398
      %p404 = scmp.eq.s32.totalorder %s29, 0
      %p405 = por %p403, %p404
      %p406 = scmp.ne.s32.totalorder %s395, %s398
      %p407 = scmp.eq.s32.totalorder %s34, 1
      %p408 = por %p406, %p407
      %p409 = scmp.ne.s32.totalorder %s398, %s399
      %p410 = scmp.eq.s32.totalorder %s34, 0
      %p411 = por %p409, %p410
      %p412 = scmp.ne.s32.totalorder %s398, %s399
      %p413 = scmp.eq.s32.totalorder %s35, 1
      %p414 = por %p412, %p413
      %p416 = scmp.ne.s32.totalorder %s399, %s415
      %p417 = scmp.eq.s32.totalorder %s35, 0
      %p418 = por %p416, %p417
      %p419 = scmp.le.s32.totalorder 1, %s29
      %p420 = scmp.lt.s32.totalorder %s29, 3
      %p421 = pnand %p419, %p420
      %p422 = pneg %p421
      // Predicated region
      $region9: #{decoder_cnn_forward.1} parent=5 // pred_check
        _
      $region10: #{decoder_cnn_forward.1} parent=5 // pred_check_branch
        %424 = sbr.rel (%p421) target = $region12
      $region11: #{decoder_cnn_forward.1} parent=5 // pred_region
        %s425 = ssub.s32 %s29, 1
        // Predicated region
        $region13: #{decoder_cnn_forward.1} parent=11 // pred_check
          %p426 = pneg %p128
        $region14: #{decoder_cnn_forward.1} parent=11 // pred_check_branch
          %428 = sbr.rel (%p426) target = $region16
        $region15: #{decoder_cnn_forward.1} parent=11 // pred_region
          _
        $region16: #{decoder_cnn_forward.1} parent=11 // pred_fallthru
          _
        // Predicated region
        $region17: #{decoder_cnn_forward.1} parent=11 // pred_check
          %p429 = pneg %p149
        $region18: #{decoder_cnn_forward.1} parent=11 // pred_check_branch
          %431 = sbr.rel (%p429) target = $region20
        $region19: #{decoder_cnn_forward.1} parent=11 // pred_region
          _
        $region20: #{decoder_cnn_forward.1} parent=11 // pred_fallthru
          _
        // Predicated region
        $region21: #{decoder_cnn_forward.1} parent=11 // pred_check
          %p432 = pneg %p170
        $region22: #{decoder_cnn_forward.1} parent=11 // pred_check_branch
          %434 = sbr.rel (%p432) target = $region24
        $region23: #{decoder_cnn_forward.1} parent=11 // pred_region
          _
        $region24: #{decoder_cnn_forward.1} parent=11 // pred_fallthru
          _
        // Predicated region
        $region25: #{decoder_cnn_forward.1} parent=11 // pred_check
          %p435 = pneg %p191
        $region26: #{decoder_cnn_forward.1} parent=11 // pred_check_branch
          %437 = sbr.rel (%p435) target = $region28
        $region27: #{decoder_cnn_forward.1} parent=11 // pred_region
          _
        $region28: #{decoder_cnn_forward.1} parent=11 // pred_fallthru
          _
        // Predicated region
        $region29: #{decoder_cnn_forward.1} parent=11 // pred_check
          %p438 = pneg %p212
        $region30: #{decoder_cnn_forward.1} parent=11 // pred_check_branch
          %440 = sbr.rel (%p438) target = $region32
        $region31: #{decoder_cnn_forward.1} parent=11 // pred_region
          _
        $region32: #{decoder_cnn_forward.1} parent=11 // pred_fallthru
          _
        // Predicated region
        $region33: #{decoder_cnn_forward.1} parent=11 // pred_check
          %p441 = pneg %p233
        $region34: #{decoder_cnn_forward.1} parent=11 // pred_check_branch
          %443 = sbr.rel (%p441) target = $region36
        $region35: #{decoder_cnn_forward.1} parent=11 // pred_region
          _
        $region36: #{decoder_cnn_forward.1} parent=11 // pred_fallthru
          _
        // Predicated region
        $region37: #{decoder_cnn_forward.1} parent=11 // pred_check
          %p444 = pneg %p254
        $region38: #{decoder_cnn_forward.1} parent=11 // pred_check_branch
          %446 = sbr.rel (%p444) target = $region40
        $region39: #{decoder_cnn_forward.1} parent=11 // pred_region
          _
        $region40: #{decoder_cnn_forward.1} parent=11 // pred_fallthru
          _
        // Predicated region
        $region41: #{decoder_cnn_forward.1} parent=11 // pred_check
          %p447 = pneg %p275
        $region42: #{decoder_cnn_forward.1} parent=11 // pred_check_branch
          %449 = sbr.rel (%p447) target = $region44
        $region43: #{decoder_cnn_forward.1} parent=11 // pred_region
          _
        $region44: #{decoder_cnn_forward.1} parent=11 // pred_fallthru
          _
        // Predicated region
        $region45: #{decoder_cnn_forward.1} parent=11 // pred_check
          %p450 = pneg %p296
        $region46: #{decoder_cnn_forward.1} parent=11 // pred_check_branch
          %452 = sbr.rel (%p450) target = $region48
        $region47: #{decoder_cnn_forward.1} parent=11 // pred_region
          _
        $region48: #{decoder_cnn_forward.1} parent=11 // pred_fallthru
          _
        // Predicated region
        $region49: #{decoder_cnn_forward.1} parent=11 // pred_check
          %p453 = pneg %p317
        $region50: #{decoder_cnn_forward.1} parent=11 // pred_check_branch
          %455 = sbr.rel (%p453) target = $region52
        $region51: #{decoder_cnn_forward.1} parent=11 // pred_region
          _
        $region52: #{decoder_cnn_forward.1} parent=11 // pred_fallthru
          _
        // Predicated region
        $region53: #{decoder_cnn_forward.1} parent=11 // pred_check
          %p456 = pneg %p338
        $region54: #{decoder_cnn_forward.1} parent=11 // pred_check_branch
          %458 = sbr.rel (%p456) target = $region56
        $region55: #{decoder_cnn_forward.1} parent=11 // pred_region
          _
        $region56: #{decoder_cnn_forward.1} parent=11 // pred_fallthru
          _
        // Predicated region
        $region57: #{decoder_cnn_forward.1} parent=11 // pred_check
          %p459 = pneg %p359
        $region58: #{decoder_cnn_forward.1} parent=11 // pred_check_branch
          %461 = sbr.rel (%p459) target = $region60
        $region59: #{decoder_cnn_forward.1} parent=11 // pred_region
          _
        $region60: #{decoder_cnn_forward.1} parent=11 // pred_fallthru
          _
      $region12: #{decoder_cnn_forward.1} parent=5 // pred_fallthru
        _
      %p462 = scmp.lt.s32.totalorder %s29, 2
      // Predicated region
      $region61: #{decoder_cnn_forward.1} parent=5 // pred_check
        %p463 = pneg %p462
      $region62: #{decoder_cnn_forward.1} parent=5 // pred_check_branch
        %465 = sbr.rel (%p463) target = $region64
      $region63: #{decoder_cnn_forward.1} parent=5 // pred_region
        // Predicated region
        $region65: #{decoder_cnn_forward.1} parent=63 // pred_check
          %p466 = pneg %p49
        $region66: #{decoder_cnn_forward.1} parent=63 // pred_check_branch
          %468 = sbr.rel (%p466) target = $region68
        $region67: #{decoder_cnn_forward.1} parent=63 // pred_region
          %p469 = scmp.lt.s32.totalorder %s29, 1
          %s470 = scalar_select %p469, %s29, 1
          %s471 = smul.addr %s470, 8
          %s472 = scalar_lea.vmem %s0, %s471
        $region68: #{decoder_cnn_forward.1} parent=63 // pred_fallthru
          _
        // Predicated region
        $region69: #{decoder_cnn_forward.1} parent=63 // pred_check
          %p473 = pneg %p75
        $region70: #{decoder_cnn_forward.1} parent=63 // pred_check_branch
          %475 = sbr.rel (%p473) target = $region72
        $region71: #{decoder_cnn_forward.1} parent=63 // pred_region
          %p476 = scmp.lt.s32.totalorder %s29, 1
          %s477 = scalar_select %p476, %s29, 1
          %s478 = smul.addr %s477, 4
          %s479 = smul.addr %s478, 8
          %s480 = scalar_lea.vmem %s1, %s479
        $region72: #{decoder_cnn_forward.1} parent=63 // pred_fallthru
          _
        // Predicated region
        $region73: #{decoder_cnn_forward.1} parent=63 // pred_check
          %p481 = pneg %p101
        $region74: #{decoder_cnn_forward.1} parent=63 // pred_check_branch
          %483 = sbr.rel (%p481) target = $region76
        $region75: #{decoder_cnn_forward.1} parent=63 // pred_region
          %p484 = scmp.lt.s32.totalorder %s29, 1
          %s485 = scalar_select %p484, %s29, 1
          %s486 = smul.addr %s485, 8
          %s487 = scalar_lea.vmem %s2, %s486
        $region76: #{decoder_cnn_forward.1} parent=63 // pred_fallthru
          _
      $region64: #{decoder_cnn_forward.1} parent=5 // pred_fallthru
        _
      %p488 = scmp.le.s32.totalorder 1, %s29
      %p489 = scmp.lt.s32.totalorder %s29, 3
      %p490 = pnand %p488, %p489
      %p491 = pneg %p490
      // Predicated region
      $region77: #{decoder_cnn_forward.1} parent=5 // pred_check
        _
      $region78: #{decoder_cnn_forward.1} parent=5 // pred_check_branch
        %493 = sbr.rel (%p490) target = $region80
      $region79: #{decoder_cnn_forward.1} parent=5 // pred_region
        %s494 = ssub.s32 %s29, 1
        %p495 = scmp.lt.s32.totalorder %s34, 1
        %s496 = scalar_select %p495, %s34, 1
        %s497 = smul.addr %s496, 8
        %s498 = scalar_lea.vmem %s0, %s497
        %p499 = pneg %p55
        %p500 = pneg %p52
        %p501 = scmp.lt.s32.totalorder %s34, 1
        %s502 = scalar_select %p501, %s34, 1
        %s503 = smul.addr %s502, 4
        %s504 = smul.addr %s503, 8
        %s505 = scalar_lea.vmem %s1, %s504
        %p506 = pneg %p81
        %p507 = pneg %p78
        %p508 = scmp.lt.s32.totalorder %s34, 1
        %s509 = scalar_select %p508, %s34, 1
        %s510 = smul.addr %s509, 8
        %s511 = scalar_lea.vmem %s2, %s510
        %p512 = pneg %p107
        %p513 = pneg %p104
        %p514 = pneg %p128
        %p515 = pneg %p125
        %p516 = pneg %p149
        %p517 = pneg %p146
        %p518 = pneg %p170
        %p519 = pneg %p167
        %p520 = pneg %p191
        %p521 = pneg %p188
        %p522 = pneg %p212
        %p523 = pneg %p209
        %p524 = pneg %p233
        %p525 = pneg %p230
        %p526 = pneg %p254
        %p527 = pneg %p251
        %p528 = pneg %p275
        %p529 = pneg %p272
        %p530 = pneg %p296
        %p531 = pneg %p293
        %p532 = pneg %p317
        %p533 = pneg %p314
        %p534 = pneg %p338
        %p535 = pneg %p335
        %p536 = pneg %p359
        %p537 = pneg %p356
        %p538 = pneg %p385
        %p539 = pneg %p382
        %s540 = sand.u32 %s372, 1
        %s541 = scalar_lea.sflag [#allocation3], %s540
        %s542 = sand.u32 %s372, 1
        %s543 = smul.addr %s542, 8
        %s544 = scalar_lea.vmem [#allocation2], %s543
        %p545 = pneg %p411
        %p546 = pneg %p408
        %s547 = sand.u32 %s398, 1
        %s548 = scalar_lea.sflag [#allocation5], %s547
        %s549 = sand.u32 %s398, 1
        %s550 = smul.addr %s549, 8
        %s551 = scalar_lea.vmem [#allocation4], %s550
        %p552 = scmp.lt.s32.totalorder %s34, 1
        %s553 = scalar_select %p552, %s34, 1
        %s554 = smul.addr %s553, 8
        %s555 = scalar_lea.vmem %s0, %s554
        %p556 = scmp.lt.s32.totalorder %s34, 1
        %s557 = scalar_select %p556, %s34, 1
        %s558 = smul.addr %s557, 4
        %s559 = smul.addr %s558, 8
        %s560 = scalar_lea.vmem %s1, %s559
        %p561 = scmp.lt.s32.totalorder %s34, 1
        %s562 = scalar_select %p561, %s34, 1
        %s563 = smul.addr %s562, 8
        %s564 = scalar_lea.vmem %s2, %s563
        %v565 = vld [vmem:[%s555] sm:$0xff]
        %v566 = vld [vmem:[%s560] sm:$0xff]
        %v567 = vld [vmem:[%s560 + $0x8] sm:$0xff]
        %v568 = vld [vmem:[%s560 + $0x10] sm:$0xff]
        %v569 = vld [vmem:[%s560 + $0x18] sm:$0xff]
        %v570 = vld [vmem:[%s564] sm:$0xff]
        %v571 = vld [vmem:[%s3] sm:$0xff]
        %v572 = vld [vmem:[%s3 + $0x8] sm:$0xff]
        %v573 = vld [vmem:[%s3 + $0x10] sm:$0xff]
        %v574 = vld [vmem:[%s3 + $0x18] sm:$0xff]
        %v575 = vld [vmem:[%s4] sm:$0x1]
        %v577 = vlaneseq
        %v578 = vshrl.u32 %v577, 7
        %v579 = vsub.s32 0, %v578
        %v580 = vrot.slane %v575, %v579
        %vm582 = vcmask 261120
        %v584 = vsel %vm582, %v565, 0
        %586 = vmatprep.subr.mxu0 0.0
        %587 = vmatpush1.msra.mxu0 0.0
        %588 = vmatprep.subr.mxu0 0.0
        %589 = vmatpush1.msra.mxu0 0.0
        %590 = vmatprep.subr.mxu0 0.0
        %591 = vmatpush1.msra.mxu0 0.0
        %592 = vmatprep.subr.mxu0 0.0
        %593 = vmatpush1.msra.mxu0 0.0
        %594 = vmatprep.subr.mxu0 0.0
        %595 = vmatpush1.msra.mxu0 0.0
        %596 = vmatprep.subr.mxu0 0.0
        %597 = vmatpush1.msra.mxu0 0.0
        %598 = vmatprep.subr.mxu0 0.0
        %599 = vmatpush1.msra.mxu0 0.0
        %600 = vmatprep.subr.mxu0 0.0
        %601 = vmatpush1.msra.mxu0 0.0
        %602 = vmatprep.subr.mxu0 0.0
        %603 = vmatpush1.msra.mxu0 0.0
        %604 = vmatprep.subr.mxu0 0.0
        %605 = vmatpush1.msra.mxu0 0.0
        %606 = vmatprep.subr.mxu0 0.0
        %607 = vmatpush1.msra.mxu0 0.0
        %608 = vmatprep.subr.mxu0 0.0
        %609 = vmatpush1.msra.mxu0 0.0
        %610 = vmatprep.subr.mxu0 0.0
        %611 = vmatpush1.msra.mxu0 %v574
        %612 = vmatprep.subr.mxu0 0.0
        %613 = vmatpush1.msra.mxu0 %v573
        %614 = vmatprep.subr.mxu0 0.0
        %615 = vmatpush1.msra.mxu0 %v572
        %616 = vmatprep.subr.mxu0 0.0
        %617 = vmatpush1.msra.mxu0 %v571
        %618 = vmatprep.subr.mxu0 0.0
        %619 = vmatpush2.msra.mxu0 0.0
        %620 = vmatprep.subr.mxu0 0.0
        %621 = vmatpush2.msra.mxu0 0.0
        %622 = vmatprep.subr.mxu0 0.0
        %623 = vmatpush2.msra.mxu0 0.0
        %624 = vmatprep.subr.mxu0 0.0
        %625 = vmatpush2.msra.mxu0 0.0
        %626 = vmatprep.subr.mxu0 0.0
        %627 = vmatpush2.msra.mxu0 0.0
        %628 = vmatprep.subr.mxu0 0.0
        %629 = vmatpush2.msra.mxu0 0.0
        %630 = vmatprep.subr.mxu0 0.0
        %631 = vmatpush2.msra.mxu0 0.0
        %632 = vmatprep.subr.mxu0 0.0
        %633 = vmatpush2.msra.mxu0 0.0
        %634 = vmatprep.subr.mxu0 0.0
        %635 = vmatpush2.msra.mxu0 0.0
        %636 = vmatprep.subr.mxu0 0.0
        %637 = vmatpush2.msra.mxu0 0.0
        %638 = vmatprep.subr.mxu0 0.0
        %639 = vmatpush2.msra.mxu0 0.0
        %640 = vmatprep.subr.mxu0 0.0
        %641 = vmatpush2.msra.mxu0 0.0
        %642 = vmatprep.subr.mxu0 0.0
        %643 = vmatpush2.msra.mxu0 0.0
        %644 = vmatprep.subr.mxu0 0.0
        %645 = vmatpush2.msra.mxu0 0.0
        %646 = vmatprep.subr.mxu0 0.0
        %647 = vmatpush2.msra.mxu0 0.0
        %648 = vmatprep.subr.mxu0 0.0
        %649 = vmatpush2.msra.mxu0 0.0
        %650 = vmatprep.mubr.f32.mxu0 0.0
        %651 = vmatmul.mubr.f32.gmra.mxu0 %v584
        %v652 = vpop.f32.mrf.mxu0
        %v653 = vadd.f32 %v580, %v652
        %v654 = vpop.f32.mrf.mxu0
        %655 = vdwg.mxu0
        %v657 = vrot.slane %v653, 6
        %vm659 = vcmask 1041408
        %v660 = vsel %vm659, 1.0, %v657
        %vm662 = vcmask 1046528
        %v663 = vrot.slane %v660, 1
        %v664 = vrot.slane %v657, 1
        %v665 = vsel %vm662, %v663, %v664
        %666 = vrot.lane.b32.xlu0 %v665, 32
        %v667 = vpop.permute.xlu0 %666
        %vm669 = vcmask 1045504
        %v670 = vrot.slane %v660, 2
        %v671 = vrot.slane %v657, 2
        %v672 = vsel %vm669, %v670, %v671
        %673 = vrot.lane.b32.xlu0 %v672, 64
        %v674 = vpop.permute.xlu0 %673
        %v676 = vsel %vm582, %v660, %v667
        %vm677 = vcmask 523264
        %v678 = vsel %vm677, %v676, %v674
        %v679 = vld [vmem:[%s5] sm:$0xff]
        %v680 = vld [vmem:[%s5 + $0x8] sm:$0xff]
        %v681 = vld [vmem:[%s5 + $0x10] sm:$0xff]
        %v682 = vld [vmem:[%s5 + $0x18] sm:$0xff]
        %v683 = vld [vmem:[%s5 + $0x20] sm:$0xff]
        %v684 = vld [vmem:[%s5 + $0x28] sm:$0xff]
        %v685 = vld [vmem:[%s5 + $0x30] sm:$0xff]
        %v686 = vld [vmem:[%s5 + $0x38] sm:$0xff]
        %v687 = vld [vmem:[%s5 + $0x40] sm:$0xff]
        %v688 = vld [vmem:[%s5 + $0x48] sm:$0xff]
        %v689 = vld [vmem:[%s5 + $0x50] sm:$0xff]
        %v690 = vld [vmem:[%s5 + $0x58] sm:$0xff]
        %v691 = vld [vmem:[%s6] sm:$0x1]
        %v693 = vlaneseq
        %v694 = vshrl.u32 %v693, 7
        %v695 = vsub.s32 0, %v694
        %v696 = vrot.slane %v691, %v695
        %vm698 = vcmask 785408
        %v700 = vsel %vm698, %v678, 0
        %702 = vmatprep.subr.mxu0 0.0
        %703 = vmatpush1.msra.mxu0 0.0
        %704 = vmatprep.subr.mxu0 0.0
        %705 = vmatpush1.msra.mxu0 0.0
        %706 = vmatprep.subr.mxu0 0.0
        %707 = vmatpush1.msra.mxu0 0.0
        %708 = vmatprep.subr.mxu0 0.0
        %709 = vmatpush1.msra.mxu0 0.0
        %710 = vmatprep.subr.mxu0 0.0
        %711 = vmatpush1.msra.mxu0 %v690
        %712 = vmatprep.subr.mxu0 0.0
        %713 = vmatpush1.msra.mxu0 %v689
        %714 = vmatprep.subr.mxu0 0.0
        %715 = vmatpush1.msra.mxu0 %v688
        %716 = vmatprep.subr.mxu0 0.0
        %717 = vmatpush1.msra.mxu0 %v687
        %718 = vmatprep.subr.mxu0 0.0
        %719 = vmatpush1.msra.mxu0 %v686
        %720 = vmatprep.subr.mxu0 0.0
        %721 = vmatpush1.msra.mxu0 %v685
        %722 = vmatprep.subr.mxu0 0.0
        %723 = vmatpush1.msra.mxu0 %v684
        %724 = vmatprep.subr.mxu0 0.0
        %725 = vmatpush1.msra.mxu0 %v683
        %726 = vmatprep.subr.mxu0 0.0
        %727 = vmatpush1.msra.mxu0 %v682
        %728 = vmatprep.subr.mxu0 0.0
        %729 = vmatpush1.msra.mxu0 %v681
        %730 = vmatprep.subr.mxu0 0.0
        %731 = vmatpush1.msra.mxu0 %v680
        %732 = vmatprep.subr.mxu0 0.0
        %733 = vmatpush1.msra.mxu0 %v679
        %734 = vmatprep.subr.mxu0 0.0
        %735 = vmatpush2.msra.mxu0 0.0
        %736 = vmatprep.subr.mxu0 0.0
        %737 = vmatpush2.msra.mxu0 0.0
        %738 = vmatprep.subr.mxu0 0.0
        %739 = vmatpush2.msra.mxu0 0.0
        %740 = vmatprep.subr.mxu0 0.0
        %741 = vmatpush2.msra.mxu0 0.0
        %742 = vmatprep.subr.mxu0 0.0
        %743 = vmatpush2.msra.mxu0 0.0
        %744 = vmatprep.subr.mxu0 0.0
        %745 = vmatpush2.msra.mxu0 0.0
        %746 = vmatprep.subr.mxu0 0.0
        %747 = vmatpush2.msra.mxu0 0.0
        %748 = vmatprep.subr.mxu0 0.0
        %749 = vmatpush2.msra.mxu0 0.0
        %750 = vmatprep.subr.mxu0 0.0
        %751 = vmatpush2.msra.mxu0 0.0
        %752 = vmatprep.subr.mxu0 0.0
        %753 = vmatpush2.msra.mxu0 0.0
        %754 = vmatprep.subr.mxu0 0.0
        %755 = vmatpush2.msra.mxu0 0.0
        %756 = vmatprep.subr.mxu0 0.0
        %757 = vmatpush2.msra.mxu0 0.0
        %758 = vmatprep.subr.mxu0 0.0
        %759 = vmatpush2.msra.mxu0 0.0
        %760 = vmatprep.subr.mxu0 0.0
        %761 = vmatpush2.msra.mxu0 0.0
        %762 = vmatprep.subr.mxu0 0.0
        %763 = vmatpush2.msra.mxu0 0.0
        %764 = vmatprep.subr.mxu0 0.0
        %765 = vmatpush2.msra.mxu0 0.0
        %766 = vmatprep.mubr.f32.mxu0 0.0
        %767 = vmatmul.mubr.f32.gmra.mxu0 %v700
        %v768 = vpop.f32.mrf.mxu0
        %v769 = vadd.f32 %v696, %v768
        %v770 = vpop.f32.mrf.mxu0
        %771 = vdwg.mxu0
        %v772 = vxor.u32 %v769, 2147483648
        %v773 = vmul.f32 %v772, 1.442695
        %v774 = vpow.pop %v773
        %v775 = vadd.f32 %v774, 1.0
        %v776 = vrcp.pop %v775
        %v777 = vmul.f32 1.0, %v776
        %779 = vrot.lane.b32.xlu0 %v777, 96
        %v780 = vpop.permute.xlu0 %779
        %v782 = vmul.f32 %v769, %v780
        %v783 = vld [vmem:[%s7] sm:$0xff]
        %v784 = vld [vmem:[%s7 + $0x8] sm:$0xff]
        %v785 = vld [vmem:[%s7 + $0x10] sm:$0xff]
        %v786 = vld [vmem:[%s7 + $0x18] sm:$0xff]
        %v787 = vld [vmem:[%s8] sm:$0x1]
        %v789 = vlaneseq
        %v790 = vshrl.u32 %v789, 7
        %v791 = vsub.s32 0, %v790
        %v792 = vrot.slane %v787, %v791
        %v795 = vsel %vm582, %v782, 0
        %797 = vmatprep.subr.mxu0 0.0
        %798 = vmatpush1.msra.mxu0 0.0
        %799 = vmatprep.subr.mxu0 0.0
        %800 = vmatpush1.msra.mxu0 0.0
        %801 = vmatprep.subr.mxu0 0.0
        %802 = vmatpush1.msra.mxu0 0.0
        %803 = vmatprep.subr.mxu0 0.0
        %804 = vmatpush1.msra.mxu0 0.0
        %805 = vmatprep.subr.mxu0 0.0
        %806 = vmatpush1.msra.mxu0 0.0
        %807 = vmatprep.subr.mxu0 0.0
        %808 = vmatpush1.msra.mxu0 0.0
        %809 = vmatprep.subr.mxu0 0.0
        %810 = vmatpush1.msra.mxu0 0.0
        %811 = vmatprep.subr.mxu0 0.0
        %812 = vmatpush1.msra.mxu0 0.0
        %813 = vmatprep.subr.mxu0 0.0
        %814 = vmatpush1.msra.mxu0 0.0
        %815 = vmatprep.subr.mxu0 0.0
        %816 = vmatpush1.msra.mxu0 0.0
        %817 = vmatprep.subr.mxu0 0.0
        %818 = vmatpush1.msra.mxu0 0.0
        %819 = vmatprep.subr.mxu0 0.0
        %820 = vmatpush1.msra.mxu0 0.0
        %821 = vmatprep.subr.mxu0 0.0
        %822 = vmatpush1.msra.mxu0 %v786
        %823 = vmatprep.subr.mxu0 0.0
        %824 = vmatpush1.msra.mxu0 %v785
        %825 = vmatprep.subr.mxu0 0.0
        %826 = vmatpush1.msra.mxu0 %v784
        %827 = vmatprep.subr.mxu0 0.0
        %828 = vmatpush1.msra.mxu0 %v783
        %829 = vmatprep.subr.mxu0 0.0
        %830 = vmatpush2.msra.mxu0 0.0
        %831 = vmatprep.subr.mxu0 0.0
        %832 = vmatpush2.msra.mxu0 0.0
        %833 = vmatprep.subr.mxu0 0.0
        %834 = vmatpush2.msra.mxu0 0.0
        %835 = vmatprep.subr.mxu0 0.0
        %836 = vmatpush2.msra.mxu0 0.0
        %837 = vmatprep.subr.mxu0 0.0
        %838 = vmatpush2.msra.mxu0 0.0
        %839 = vmatprep.subr.mxu0 0.0
        %840 = vmatpush2.msra.mxu0 0.0
        %841 = vmatprep.subr.mxu0 0.0
        %842 = vmatpush2.msra.mxu0 0.0
        %843 = vmatprep.subr.mxu0 0.0
        %844 = vmatpush2.msra.mxu0 0.0
        %845 = vmatprep.subr.mxu0 0.0
        %846 = vmatpush2.msra.mxu0 0.0
        %847 = vmatprep.subr.mxu0 0.0
        %848 = vmatpush2.msra.mxu0 0.0
        %849 = vmatprep.subr.mxu0 0.0
        %850 = vmatpush2.msra.mxu0 0.0
        %851 = vmatprep.subr.mxu0 0.0
        %852 = vmatpush2.msra.mxu0 0.0
        %853 = vmatprep.subr.mxu0 0.0
        %854 = vmatpush2.msra.mxu0 0.0
        %855 = vmatprep.subr.mxu0 0.0
        %856 = vmatpush2.msra.mxu0 0.0
        %857 = vmatprep.subr.mxu0 0.0
        %858 = vmatpush2.msra.mxu0 0.0
        %859 = vmatprep.subr.mxu0 0.0
        %860 = vmatpush2.msra.mxu0 0.0
        %861 = vmatprep.mubr.f32.mxu0 0.0
        %862 = vmatmul.mubr.f32.gmra.mxu0 %v795
        %v863 = vpop.f32.mrf.mxu0
        %v864 = vadd.f32 %v792, %v863
        %v865 = vpop.f32.mrf.mxu0
        %866 = vdwg.mxu0
        %v867 = vadd.f32 %v864, %v565
        %v868 = vmul.f32 %v867, 0.70710677
        %v870 = vsel %vm582, %v868, 0
        %872 = vmatprep.subr.mxu0 0.0
        %873 = vmatpush1.msra.mxu0 0.0
        %874 = vmatprep.subr.mxu0 0.0
        %875 = vmatpush1.msra.mxu0 0.0
        %876 = vmatprep.subr.mxu0 0.0
        %877 = vmatpush1.msra.mxu0 0.0
        %878 = vmatprep.subr.mxu0 0.0
        %879 = vmatpush1.msra.mxu0 0.0
        %880 = vmatprep.subr.mxu0 0.0
        %881 = vmatpush1.msra.mxu0 0.0
        %882 = vmatprep.subr.mxu0 0.0
        %883 = vmatpush1.msra.mxu0 0.0
        %884 = vmatprep.subr.mxu0 0.0
        %885 = vmatpush1.msra.mxu0 0.0
        %886 = vmatprep.subr.mxu0 0.0
        %887 = vmatpush1.msra.mxu0 0.0
        %888 = vmatprep.subr.mxu0 0.0
        %889 = vmatpush1.msra.mxu0 0.0
        %890 = vmatprep.subr.mxu0 0.0
        %891 = vmatpush1.msra.mxu0 0.0
        %892 = vmatprep.subr.mxu0 0.0
        %893 = vmatpush1.msra.mxu0 0.0
        %894 = vmatprep.subr.mxu0 0.0
        %895 = vmatpush1.msra.mxu0 0.0
        %896 = vmatprep.subr.mxu0 0.0
        %897 = vmatpush1.msra.mxu0 %v569
        %898 = vmatprep.subr.mxu0 0.0
        %899 = vmatpush1.msra.mxu0 %v568
        %900 = vmatprep.subr.mxu0 0.0
        %901 = vmatpush1.msra.mxu0 %v567
        %902 = vmatprep.subr.mxu0 0.0
        %903 = vmatpush1.msra.mxu0 %v566
        %904 = vmatprep.subr.mxu0 0.0
        %905 = vmatpush2.msra.mxu0 0.0
        %906 = vmatprep.subr.mxu0 0.0
        %907 = vmatpush2.msra.mxu0 0.0
        %908 = vmatprep.subr.mxu0 0.0
        %909 = vmatpush2.msra.mxu0 0.0
        %910 = vmatprep.subr.mxu0 0.0
        %911 = vmatpush2.msra.mxu0 0.0
        %912 = vmatprep.subr.mxu0 0.0
        %913 = vmatpush2.msra.mxu0 0.0
        %914 = vmatprep.subr.mxu0 0.0
        %915 = vmatpush2.msra.mxu0 0.0
        %916 = vmatprep.subr.mxu0 0.0
        %917 = vmatpush2.msra.mxu0 0.0
        %918 = vmatprep.subr.mxu0 0.0
        %919 = vmatpush2.msra.mxu0 0.0
        %920 = vmatprep.subr.mxu0 0.0
        %921 = vmatpush2.msra.mxu0 0.0
        %922 = vmatprep.subr.mxu0 0.0
        %923 = vmatpush2.msra.mxu0 0.0
        %924 = vmatprep.subr.mxu0 0.0
        %925 = vmatpush2.msra.mxu0 0.0
        %926 = vmatprep.subr.mxu0 0.0
        %927 = vmatpush2.msra.mxu0 0.0
        %928 = vmatprep.subr.mxu0 0.0
        %929 = vmatpush2.msra.mxu0 0.0
        %930 = vmatprep.subr.mxu0 0.0
        %931 = vmatpush2.msra.mxu0 0.0
        %932 = vmatprep.subr.mxu0 0.0
        %933 = vmatpush2.msra.mxu0 0.0
        %934 = vmatprep.subr.mxu0 0.0
        %935 = vmatpush2.msra.mxu0 0.0
        %936 = vmatprep.mubr.f32.mxu0 0.0
        %937 = vmatmul.mubr.f32.gmra.mxu0 %v870
        %v938 = vpop.f32.mrf.mxu0
        %v939 = vadd.f32 0.0, %v938
        %v940 = vpop.f32.mrf.mxu0
        %941 = vdwg.mxu0
        %vm942 = vcmask 64512
        %v943 = vsel %vm942, %v939, -inf
        %944 = vmax.xlane.f32.xlu0 %v943
        %v945 = vpop.xlane.xlu0 %944
        %v946 = vsub.f32 %v939, %v945
        %v947 = vmul.f32 %v946, 1.442695
        %v948 = vpow.pop %v947
        %v949 = vsel %vm942, %v948, 0.0
        %950 = vadd.xlane.f32.xlu0 %v949
        %v951 = vpop.xlane.xlu0 %950
        %v952 = vrcp.pop %v951
        %v953 = vmul.f32 %v948, %v952
        %v955 = vsel %vm942, %v953, 0
        %957 = vmatprep.subr.mxu0 0.0
        %958 = vmatpush1.msra.mxu0 0.0
        %959 = vmatprep.subr.mxu0 0.0
        %960 = vmatpush1.msra.mxu0 0.0
        %961 = vmatprep.subr.mxu0 0.0
        %962 = vmatpush1.msra.mxu0 0.0
        %963 = vmatprep.subr.mxu0 0.0
        %964 = vmatpush1.msra.mxu0 0.0
        %965 = vmatprep.subr.mxu0 0.0
        %966 = vmatpush1.msra.mxu0 0.0
        %967 = vmatprep.subr.mxu0 0.0
        %968 = vmatpush1.msra.mxu0 0.0
        %969 = vmatprep.subr.mxu0 0.0
        %970 = vmatpush1.msra.mxu0 0.0
        %971 = vmatprep.subr.mxu0 0.0
        %972 = vmatpush1.msra.mxu0 0.0
        %973 = vmatprep.subr.mxu0 0.0
        %974 = vmatpush1.msra.mxu0 0.0
        %975 = vmatprep.subr.mxu0 0.0
        %976 = vmatpush1.msra.mxu0 0.0
        %977 = vmatprep.subr.mxu0 0.0
        %978 = vmatpush1.msra.mxu0 0.0
        %979 = vmatprep.subr.mxu0 0.0
        %980 = vmatpush1.msra.mxu0 0.0
        %981 = vmatprep.subr.mxu0 0.0
        %982 = vmatpush1.msra.mxu0 0.0
        %983 = vmatprep.subr.mxu0 0.0
        %984 = vmatpush1.msra.mxu0 0.0
        %985 = vmatprep.subr.mxu0 0.0
        %986 = vmatpush1.msra.mxu0 0.0
        %987 = vmatprep.subr.mxu0 0.0
        %988 = vmatpush1.msra.mxu0 %v570
        %989 = vmatprep.subr.mxu0 0.0
        %990 = vmatpush2.msra.mxu0 0.0
        %991 = vmatprep.subr.mxu0 0.0
        %992 = vmatpush2.msra.mxu0 0.0
        %993 = vmatprep.subr.mxu0 0.0
        %994 = vmatpush2.msra.mxu0 0.0
        %995 = vmatprep.subr.mxu0 0.0
        %996 = vmatpush2.msra.mxu0 0.0
        %997 = vmatprep.subr.mxu0 0.0
        %998 = vmatpush2.msra.mxu0 0.0
        %999 = vmatprep.subr.mxu0 0.0
        %1000 = vmatpush2.msra.mxu0 0.0
        %1001 = vmatprep.subr.mxu0 0.0
        %1002 = vmatpush2.msra.mxu0 0.0
        %1003 = vmatprep.subr.mxu0 0.0
        %1004 = vmatpush2.msra.mxu0 0.0
        %1005 = vmatprep.subr.mxu0 0.0
        %1006 = vmatpush2.msra.mxu0 0.0
        %1007 = vmatprep.subr.mxu0 0.0
        %1008 = vmatpush2.msra.mxu0 0.0
        %1009 = vmatprep.subr.mxu0 0.0
        %1010 = vmatpush2.msra.mxu0 0.0
        %1011 = vmatprep.subr.mxu0 0.0
        %1012 = vmatpush2.msra.mxu0 0.0
        %1013 = vmatprep.subr.mxu0 0.0
        %1014 = vmatpush2.msra.mxu0 0.0
        %1015 = vmatprep.subr.mxu0 0.0
        %1016 = vmatpush2.msra.mxu0 0.0
        %1017 = vmatprep.subr.mxu0 0.0
        %1018 = vmatpush2.msra.mxu0 0.0
        %1019 = vmatprep.subr.mxu0 0.0
        %1020 = vmatpush2.msra.mxu0 0.0
        %1021 = vmatprep.mubr.f32.mxu0 0.0
        %1022 = vmatmul.mubr.f32.gmra.mxu0 %v955
        %v1023 = vpop.f32.mrf.mxu0
        %v1024 = vadd.f32 0.0, %v1023
        %v1025 = vpop.f32.mrf.mxu0
        %1026 = vdwg.mxu0
        %v1027 = vld [vmem:[%s9] sm:$0xff]
        %v1028 = vld [vmem:[%s9 + $0x8] sm:$0xff]
        %v1029 = vld [vmem:[%s9 + $0x10] sm:$0xff]
        %v1030 = vld [vmem:[%s9 + $0x18] sm:$0xff]
        %v1031 = vld [vmem:[%s10] sm:$0x1]
        %v1033 = vlaneseq
        %v1034 = vshrl.u32 %v1033, 7
        %v1035 = vsub.s32 0, %v1034
        %v1036 = vrot.slane %v1031, %v1035
        %v1039 = vsel %vm582, %v1024, 0
        %1041 = vmatprep.subr.mxu0 0.0
        %1042 = vmatpush1.msra.mxu0 0.0
        %1043 = vmatprep.subr.mxu0 0.0
        %1044 = vmatpush1.msra.mxu0 0.0
        %1045 = vmatprep.subr.mxu0 0.0
        %1046 = vmatpush1.msra.mxu0 0.0
        %1047 = vmatprep.subr.mxu0 0.0
        %1048 = vmatpush1.msra.mxu0 0.0
        %1049 = vmatprep.subr.mxu0 0.0
        %1050 = vmatpush1.msra.mxu0 0.0
        %1051 = vmatprep.subr.mxu0 0.0
        %1052 = vmatpush1.msra.mxu0 0.0
        %1053 = vmatprep.subr.mxu0 0.0
        %1054 = vmatpush1.msra.mxu0 0.0
        %1055 = vmatprep.subr.mxu0 0.0
        %1056 = vmatpush1.msra.mxu0 0.0
        %1057 = vmatprep.subr.mxu0 0.0
        %1058 = vmatpush1.msra.mxu0 0.0
        %1059 = vmatprep.subr.mxu0 0.0
        %1060 = vmatpush1.msra.mxu0 0.0
        %1061 = vmatprep.subr.mxu0 0.0
        %1062 = vmatpush1.msra.mxu0 0.0
        %1063 = vmatprep.subr.mxu0 0.0
        %1064 = vmatpush1.msra.mxu0 0.0
        %1065 = vmatprep.subr.mxu0 0.0
        %1066 = vmatpush1.msra.mxu0 %v1030
        %1067 = vmatprep.subr.mxu0 0.0
        %1068 = vmatpush1.msra.mxu0 %v1029
        %1069 = vmatprep.subr.mxu0 0.0
        %1070 = vmatpush1.msra.mxu0 %v1028
        %1071 = vmatprep.subr.mxu0 0.0
        %1072 = vmatpush1.msra.mxu0 %v1027
        %1073 = vmatprep.subr.mxu0 0.0
        %1074 = vmatpush2.msra.mxu0 0.0
        %1075 = vmatprep.subr.mxu0 0.0
        %1076 = vmatpush2.msra.mxu0 0.0
        %1077 = vmatprep.subr.mxu0 0.0
        %1078 = vmatpush2.msra.mxu0 0.0
        %1079 = vmatprep.subr.mxu0 0.0
        %1080 = vmatpush2.msra.mxu0 0.0
        %1081 = vmatprep.subr.mxu0 0.0
        %1082 = vmatpush2.msra.mxu0 0.0
        %1083 = vmatprep.subr.mxu0 0.0
        %1084 = vmatpush2.msra.mxu0 0.0
        %1085 = vmatprep.subr.mxu0 0.0
        %1086 = vmatpush2.msra.mxu0 0.0
        %1087 = vmatprep.subr.mxu0 0.0
        %1088 = vmatpush2.msra.mxu0 0.0
        %1089 = vmatprep.subr.mxu0 0.0
        %1090 = vmatpush2.msra.mxu0 0.0
        %1091 = vmatprep.subr.mxu0 0.0
        %1092 = vmatpush2.msra.mxu0 0.0
        %1093 = vmatprep.subr.mxu0 0.0
        %1094 = vmatpush2.msra.mxu0 0.0
        %1095 = vmatprep.subr.mxu0 0.0
        %1096 = vmatpush2.msra.mxu0 0.0
        %1097 = vmatprep.subr.mxu0 0.0
        %1098 = vmatpush2.msra.mxu0 0.0
        %1099 = vmatprep.subr.mxu0 0.0
        %1100 = vmatpush2.msra.mxu0 0.0
        %1101 = vmatprep.subr.mxu0 0.0
        %1102 = vmatpush2.msra.mxu0 0.0
        %1103 = vmatprep.subr.mxu0 0.0
        %1104 = vmatpush2.msra.mxu0 0.0
        %1105 = vmatprep.mubr.f32.mxu0 0.0
        %1106 = vmatmul.mubr.f32.gmra.mxu0 %v1039
        %v1107 = vpop.f32.mrf.mxu0
        %v1108 = vadd.f32 %v1036, %v1107
        %v1109 = vpop.f32.mrf.mxu0
        %1110 = vdwg.mxu0
        %v1111 = vadd.f32 %v782, %v1108
        %v1112 = vmul.f32 %v1111, 0.70710677
        %v1113 = vadd.f32 %v1112, %v653
        %v1114 = vmul.f32 %v1113, 0.70710677
        %v1116 = vrot.slane %v1114, 6
        %v1118 = vsel %vm659, 1.0, %v1116
        %v1120 = vrot.slane %v1118, 1
        %v1121 = vrot.slane %v1116, 1
        %v1122 = vsel %vm662, %v1120, %v1121
        %1123 = vrot.lane.b32.xlu0 %v1122, 32
        %v1124 = vpop.permute.xlu0 %1123
        %v1126 = vrot.slane %v1118, 2
        %v1127 = vrot.slane %v1116, 2
        %v1128 = vsel %vm669, %v1126, %v1127
        %1129 = vrot.lane.b32.xlu0 %v1128, 64
        %v1130 = vpop.permute.xlu0 %1129
        %v1132 = vsel %vm582, %v1118, %v1124
        %v1133 = vsel %vm677, %v1132, %v1130
        %s1134 = scalar_lea.vmem %s5, 96
        %v1135 = vld [vmem:[%s1134] sm:$0xff]
        %v1136 = vld [vmem:[%s1134 + $0x8] sm:$0xff]
        %v1137 = vld [vmem:[%s1134 + $0x10] sm:$0xff]
        %v1138 = vld [vmem:[%s1134 + $0x18] sm:$0xff]
        %v1139 = vld [vmem:[%s1134 + $0x20] sm:$0xff]
        %v1140 = vld [vmem:[%s1134 + $0x28] sm:$0xff]
        %v1141 = vld [vmem:[%s1134 + $0x30] sm:$0xff]
        %v1142 = vld [vmem:[%s1134 + $0x38] sm:$0xff]
        %v1143 = vld [vmem:[%s1134 + $0x40] sm:$0xff]
        %v1144 = vld [vmem:[%s1134 + $0x48] sm:$0xff]
        %v1145 = vld [vmem:[%s1134 + $0x50] sm:$0xff]
        %v1146 = vld [vmem:[%s1134 + $0x58] sm:$0xff]
        %s1147 = scalar_lea.vmem %s6, 1
        %v1148 = vld [vmem:[%s1147] sm:$0x1]
        %v1150 = vlaneseq
        %v1151 = vshrl.u32 %v1150, 7
        %v1152 = vsub.s32 0, %v1151
        %v1153 = vrot.slane %v1148, %v1152
        %v1156 = vsel %vm698, %v1133, 0
        %1158 = vmatprep.subr.mxu0 0.0
        %1159 = vmatpush1.msra.mxu0 0.0
        %1160 = vmatprep.subr.mxu0 0.0
        %1161 = vmatpush1.msra.mxu0 0.0
        %1162 = vmatprep.subr.mxu0 0.0
        %1163 = vmatpush1.msra.mxu0 0.0
        %1164 = vmatprep.subr.mxu0 0.0
        %1165 = vmatpush1.msra.mxu0 0.0
        %1166 = vmatprep.subr.mxu0 0.0
        %1167 = vmatpush1.msra.mxu0 %v1146
        %1168 = vmatprep.subr.mxu0 0.0
        %1169 = vmatpush1.msra.mxu0 %v1145
        %1170 = vmatprep.subr.mxu0 0.0
        %1171 = vmatpush1.msra.mxu0 %v1144
        %1172 = vmatprep.subr.mxu0 0.0
        %1173 = vmatpush1.msra.mxu0 %v1143
        %1174 = vmatprep.subr.mxu0 0.0
        %1175 = vmatpush1.msra.mxu0 %v1142
        %1176 = vmatprep.subr.mxu0 0.0
        %1177 = vmatpush1.msra.mxu0 %v1141
        %1178 = vmatprep.subr.mxu0 0.0
        %1179 = vmatpush1.msra.mxu0 %v1140
        %1180 = vmatprep.subr.mxu0 0.0
        %1181 = vmatpush1.msra.mxu0 %v1139
        %1182 = vmatprep.subr.mxu0 0.0
        %1183 = vmatpush1.msra.mxu0 %v1138
        %1184 = vmatprep.subr.mxu0 0.0
        %1185 = vmatpush1.msra.mxu0 %v1137
        %1186 = vmatprep.subr.mxu0 0.0
        %1187 = vmatpush1.msra.mxu0 %v1136
        %1188 = vmatprep.subr.mxu0 0.0
        %1189 = vmatpush1.msra.mxu0 %v1135
        %1190 = vmatprep.subr.mxu0 0.0
        %1191 = vmatpush2.msra.mxu0 0.0
        %1192 = vmatprep.subr.mxu0 0.0
        %1193 = vmatpush2.msra.mxu0 0.0
        %1194 = vmatprep.subr.mxu0 0.0
        %1195 = vmatpush2.msra.mxu0 0.0
        %1196 = vmatprep.subr.mxu0 0.0
        %1197 = vmatpush2.msra.mxu0 0.0
        %1198 = vmatprep.subr.mxu0 0.0
        %1199 = vmatpush2.msra.mxu0 0.0
        %1200 = vmatprep.subr.mxu0 0.0
        %1201 = vmatpush2.msra.mxu0 0.0
        %1202 = vmatprep.subr.mxu0 0.0
        %1203 = vmatpush2.msra.mxu0 0.0
        %1204 = vmatprep.subr.mxu0 0.0
        %1205 = vmatpush2.msra.mxu0 0.0
        %1206 = vmatprep.subr.mxu0 0.0
        %1207 = vmatpush2.msra.mxu0 0.0
        %1208 = vmatprep.subr.mxu0 0.0
        %1209 = vmatpush2.msra.mxu0 0.0
        %1210 = vmatprep.subr.mxu0 0.0
        %1211 = vmatpush2.msra.mxu0 0.0
        %1212 = vmatprep.subr.mxu0 0.0
        %1213 = vmatpush2.msra.mxu0 0.0
        %1214 = vmatprep.subr.mxu0 0.0
        %1215 = vmatpush2.msra.mxu0 0.0
        %1216 = vmatprep.subr.mxu0 0.0
        %1217 = vmatpush2.msra.mxu0 0.0
        %1218 = vmatprep.subr.mxu0 0.0
        %1219 = vmatpush2.msra.mxu0 0.0
        %1220 = vmatprep.subr.mxu0 0.0
        %1221 = vmatpush2.msra.mxu0 0.0
        %1222 = vmatprep.mubr.f32.mxu0 0.0
        %1223 = vmatmul.mubr.f32.gmra.mxu0 %v1156
        %v1224 = vpop.f32.mrf.mxu0
        %v1225 = vadd.f32 %v1153, %v1224
        %v1226 = vpop.f32.mrf.mxu0
        %1227 = vdwg.mxu0
        %v1228 = vxor.u32 %v1225, 2147483648
        %v1229 = vmul.f32 %v1228, 1.442695
        %v1230 = vpow.pop %v1229
        %v1231 = vadd.f32 %v1230, 1.0
        %v1232 = vrcp.pop %v1231
        %v1233 = vmul.f32 1.0, %v1232
        %1235 = vrot.lane.b32.xlu0 %v1233, 96
        %v1236 = vpop.permute.xlu0 %1235
        %v1238 = vmul.f32 %v1225, %v1236
        %s1239 = scalar_lea.vmem %s7, 32
        %v1240 = vld [vmem:[%s1239] sm:$0xff]
        %v1241 = vld [vmem:[%s1239 + $0x8] sm:$0xff]
        %v1242 = vld [vmem:[%s1239 + $0x10] sm:$0xff]
        %v1243 = vld [vmem:[%s1239 + $0x18] sm:$0xff]
        %s1244 = scalar_lea.vmem %s8, 1
        %v1245 = vld [vmem:[%s1244] sm:$0x1]
        %v1247 = vlaneseq
        %v1248 = vshrl.u32 %v1247, 7
        %v1249 = vsub.s32 0, %v1248
        %v1250 = vrot.slane %v1245, %v1249
        %v1253 = vsel %vm582, %v1238, 0
        %1255 = vmatprep.subr.mxu0 0.0
        %1256 = vmatpush1.msra.mxu0 0.0
        %1257 = vmatprep.subr.mxu0 0.0
        %1258 = vmatpush1.msra.mxu0 0.0
        %1259 = vmatprep.subr.mxu0 0.0
        %1260 = vmatpush1.msra.mxu0 0.0
        %1261 = vmatprep.subr.mxu0 0.0
        %1262 = vmatpush1.msra.mxu0 0.0
        %1263 = vmatprep.subr.mxu0 0.0
        %1264 = vmatpush1.msra.mxu0 0.0
        %1265 = vmatprep.subr.mxu0 0.0
        %1266 = vmatpush1.msra.mxu0 0.0
        %1267 = vmatprep.subr.mxu0 0.0
        %1268 = vmatpush1.msra.mxu0 0.0
        %1269 = vmatprep.subr.mxu0 0.0
        %1270 = vmatpush1.msra.mxu0 0.0
        %1271 = vmatprep.subr.mxu0 0.0
        %1272 = vmatpush1.msra.mxu0 0.0
        %1273 = vmatprep.subr.mxu0 0.0
        %1274 = vmatpush1.msra.mxu0 0.0
        %1275 = vmatprep.subr.mxu0 0.0
        %1276 = vmatpush1.msra.mxu0 0.0
        %1277 = vmatprep.subr.mxu0 0.0
        %1278 = vmatpush1.msra.mxu0 0.0
        %1279 = vmatprep.subr.mxu0 0.0
        %1280 = vmatpush1.msra.mxu0 %v1243
        %1281 = vmatprep.subr.mxu0 0.0
        %1282 = vmatpush1.msra.mxu0 %v1242
        %1283 = vmatprep.subr.mxu0 0.0
        %1284 = vmatpush1.msra.mxu0 %v1241
        %1285 = vmatprep.subr.mxu0 0.0
        %1286 = vmatpush1.msra.mxu0 %v1240
        %1287 = vmatprep.subr.mxu0 0.0
        %1288 = vmatpush2.msra.mxu0 0.0
        %1289 = vmatprep.subr.mxu0 0.0
        %1290 = vmatpush2.msra.mxu0 0.0
        %1291 = vmatprep.subr.mxu0 0.0
        %1292 = vmatpush2.msra.mxu0 0.0
        %1293 = vmatprep.subr.mxu0 0.0
        %1294 = vmatpush2.msra.mxu0 0.0
        %1295 = vmatprep.subr.mxu0 0.0
        %1296 = vmatpush2.msra.mxu0 0.0
        %1297 = vmatprep.subr.mxu0 0.0
        %1298 = vmatpush2.msra.mxu0 0.0
        %1299 = vmatprep.subr.mxu0 0.0
        %1300 = vmatpush2.msra.mxu0 0.0
        %1301 = vmatprep.subr.mxu0 0.0
        %1302 = vmatpush2.msra.mxu0 0.0
        %1303 = vmatprep.subr.mxu0 0.0
        %1304 = vmatpush2.msra.mxu0 0.0
        %1305 = vmatprep.subr.mxu0 0.0
        %1306 = vmatpush2.msra.mxu0 0.0
        %1307 = vmatprep.subr.mxu0 0.0
        %1308 = vmatpush2.msra.mxu0 0.0
        %1309 = vmatprep.subr.mxu0 0.0
        %1310 = vmatpush2.msra.mxu0 0.0
        %1311 = vmatprep.subr.mxu0 0.0
        %1312 = vmatpush2.msra.mxu0 0.0
        %1313 = vmatprep.subr.mxu0 0.0
        %1314 = vmatpush2.msra.mxu0 0.0
        %1315 = vmatprep.subr.mxu0 0.0
        %1316 = vmatpush2.msra.mxu0 0.0
        %1317 = vmatprep.subr.mxu0 0.0
        %1318 = vmatpush2.msra.mxu0 0.0
        %1319 = vmatprep.mubr.f32.mxu0 0.0
        %1320 = vmatmul.mubr.f32.gmra.mxu0 %v1253
        %v1321 = vpop.f32.mrf.mxu0
        %v1322 = vadd.f32 %v1250, %v1321
        %v1323 = vpop.f32.mrf.mxu0
        %1324 = vdwg.mxu0
        %v1325 = vadd.f32 %v1322, %v565
        %v1326 = vmul.f32 %v1325, 0.70710677
        %v1328 = vsel %vm582, %v1326, 0
        %1330 = vmatprep.subr.mxu0 0.0
        %1331 = vmatpush1.msra.mxu0 0.0
        %1332 = vmatprep.subr.mxu0 0.0
        %1333 = vmatpush1.msra.mxu0 0.0
        %1334 = vmatprep.subr.mxu0 0.0
        %1335 = vmatpush1.msra.mxu0 0.0
        %1336 = vmatprep.subr.mxu0 0.0
        %1337 = vmatpush1.msra.mxu0 0.0
        %1338 = vmatprep.subr.mxu0 0.0
        %1339 = vmatpush1.msra.mxu0 0.0
        %1340 = vmatprep.subr.mxu0 0.0
        %1341 = vmatpush1.msra.mxu0 0.0
        %1342 = vmatprep.subr.mxu0 0.0
        %1343 = vmatpush1.msra.mxu0 0.0
        %1344 = vmatprep.subr.mxu0 0.0
        %1345 = vmatpush1.msra.mxu0 0.0
        %1346 = vmatprep.subr.mxu0 0.0
        %1347 = vmatpush1.msra.mxu0 0.0
        %1348 = vmatprep.subr.mxu0 0.0
        %1349 = vmatpush1.msra.mxu0 0.0
        %1350 = vmatprep.subr.mxu0 0.0
        %1351 = vmatpush1.msra.mxu0 0.0
        %1352 = vmatprep.subr.mxu0 0.0
        %1353 = vmatpush1.msra.mxu0 0.0
        %1354 = vmatprep.subr.mxu0 0.0
        %1355 = vmatpush1.msra.mxu0 %v569
        %1356 = vmatprep.subr.mxu0 0.0
        %1357 = vmatpush1.msra.mxu0 %v568
        %1358 = vmatprep.subr.mxu0 0.0
        %1359 = vmatpush1.msra.mxu0 %v567
        %1360 = vmatprep.subr.mxu0 0.0
        %1361 = vmatpush1.msra.mxu0 %v566
        %1362 = vmatprep.subr.mxu0 0.0
        %1363 = vmatpush2.msra.mxu0 0.0
        %1364 = vmatprep.subr.mxu0 0.0
        %1365 = vmatpush2.msra.mxu0 0.0
        %1366 = vmatprep.subr.mxu0 0.0
        %1367 = vmatpush2.msra.mxu0 0.0
        %1368 = vmatprep.subr.mxu0 0.0
        %1369 = vmatpush2.msra.mxu0 0.0
        %1370 = vmatprep.subr.mxu0 0.0
        %1371 = vmatpush2.msra.mxu0 0.0
        %1372 = vmatprep.subr.mxu0 0.0
        %1373 = vmatpush2.msra.mxu0 0.0
        %1374 = vmatprep.subr.mxu0 0.0
        %1375 = vmatpush2.msra.mxu0 0.0
        %1376 = vmatprep.subr.mxu0 0.0
        %1377 = vmatpush2.msra.mxu0 0.0
        %1378 = vmatprep.subr.mxu0 0.0
        %1379 = vmatpush2.msra.mxu0 0.0
        %1380 = vmatprep.subr.mxu0 0.0
        %1381 = vmatpush2.msra.mxu0 0.0
        %1382 = vmatprep.subr.mxu0 0.0
        %1383 = vmatpush2.msra.mxu0 0.0
        %1384 = vmatprep.subr.mxu0 0.0
        %1385 = vmatpush2.msra.mxu0 0.0
        %1386 = vmatprep.subr.mxu0 0.0
        %1387 = vmatpush2.msra.mxu0 0.0
        %1388 = vmatprep.subr.mxu0 0.0
        %1389 = vmatpush2.msra.mxu0 0.0
        %1390 = vmatprep.subr.mxu0 0.0
        %1391 = vmatpush2.msra.mxu0 0.0
        %1392 = vmatprep.subr.mxu0 0.0
        %1393 = vmatpush2.msra.mxu0 0.0
        %1394 = vmatprep.mubr.f32.mxu0 0.0
        %1395 = vmatmul.mubr.f32.gmra.mxu0 %v1328
        %v1396 = vpop.f32.mrf.mxu0
        %v1397 = vadd.f32 0.0, %v1396
        %v1398 = vpop.f32.mrf.mxu0
        %1399 = vdwg.mxu0
        %v1400 = vsel %vm942, %v1397, -inf
        %1401 = vmax.xlane.f32.xlu0 %v1400
        %v1402 = vpop.xlane.xlu0 %1401
        %v1403 = vsub.f32 %v1397, %v1402
        %v1404 = vmul.f32 %v1403, 1.442695
        %v1405 = vpow.pop %v1404
        %v1406 = vsel %vm942, %v1405, 0.0
        %1407 = vadd.xlane.f32.xlu0 %v1406
        %v1408 = vpop.xlane.xlu0 %1407
        %v1409 = vrcp.pop %v1408
        %v1410 = vmul.f32 %v1405, %v1409
        %v1412 = vsel %vm942, %v1410, 0
        %1414 = vmatprep.subr.mxu0 0.0
        %1415 = vmatpush1.msra.mxu0 0.0
        %1416 = vmatprep.subr.mxu0 0.0
        %1417 = vmatpush1.msra.mxu0 0.0
        %1418 = vmatprep.subr.mxu0 0.0
        %1419 = vmatpush1.msra.mxu0 0.0
        %1420 = vmatprep.subr.mxu0 0.0
        %1421 = vmatpush1.msra.mxu0 0.0
        %1422 = vmatprep.subr.mxu0 0.0
        %1423 = vmatpush1.msra.mxu0 0.0
        %1424 = vmatprep.subr.mxu0 0.0
        %1425 = vmatpush1.msra.mxu0 0.0
        %1426 = vmatprep.subr.mxu0 0.0
        %1427 = vmatpush1.msra.mxu0 0.0
        %1428 = vmatprep.subr.mxu0 0.0
        %1429 = vmatpush1.msra.mxu0 0.0
        %1430 = vmatprep.subr.mxu0 0.0
        %1431 = vmatpush1.msra.mxu0 0.0
        %1432 = vmatprep.subr.mxu0 0.0
        %1433 = vmatpush1.msra.mxu0 0.0
        %1434 = vmatprep.subr.mxu0 0.0
        %1435 = vmatpush1.msra.mxu0 0.0
        %1436 = vmatprep.subr.mxu0 0.0
        %1437 = vmatpush1.msra.mxu0 0.0
        %1438 = vmatprep.subr.mxu0 0.0
        %1439 = vmatpush1.msra.mxu0 0.0
        %1440 = vmatprep.subr.mxu0 0.0
        %1441 = vmatpush1.msra.mxu0 0.0
        %1442 = vmatprep.subr.mxu0 0.0
        %1443 = vmatpush1.msra.mxu0 0.0
        %1444 = vmatprep.subr.mxu0 0.0
        %1445 = vmatpush1.msra.mxu0 %v570
        %1446 = vmatprep.subr.mxu0 0.0
        %1447 = vmatpush2.msra.mxu0 0.0
        %1448 = vmatprep.subr.mxu0 0.0
        %1449 = vmatpush2.msra.mxu0 0.0
        %1450 = vmatprep.subr.mxu0 0.0
        %1451 = vmatpush2.msra.mxu0 0.0
        %1452 = vmatprep.subr.mxu0 0.0
        %1453 = vmatpush2.msra.mxu0 0.0
        %1454 = vmatprep.subr.mxu0 0.0
        %1455 = vmatpush2.msra.mxu0 0.0
        %1456 = vmatprep.subr.mxu0 0.0
        %1457 = vmatpush2.msra.mxu0 0.0
        %1458 = vmatprep.subr.mxu0 0.0
        %1459 = vmatpush2.msra.mxu0 0.0
        %1460 = vmatprep.subr.mxu0 0.0
        %1461 = vmatpush2.msra.mxu0 0.0
        %1462 = vmatprep.subr.mxu0 0.0
        %1463 = vmatpush2.msra.mxu0 0.0
        %1464 = vmatprep.subr.mxu0 0.0
        %1465 = vmatpush2.msra.mxu0 0.0
        %1466 = vmatprep.subr.mxu0 0.0
        %1467 = vmatpush2.msra.mxu0 0.0
        %1468 = vmatprep.subr.mxu0 0.0
        %1469 = vmatpush2.msra.mxu0 0.0
        %1470 = vmatprep.subr.mxu0 0.0
        %1471 = vmatpush2.msra.mxu0 0.0
        %1472 = vmatprep.subr.mxu0 0.0
        %1473 = vmatpush2.msra.mxu0 0.0
        %1474 = vmatprep.subr.mxu0 0.0
        %1475 = vmatpush2.msra.mxu0 0.0
        %1476 = vmatprep.subr.mxu0 0.0
        %1477 = vmatpush2.msra.mxu0 0.0
        %1478 = vmatprep.mubr.f32.mxu0 0.0
        %1479 = vmatmul.mubr.f32.gmra.mxu0 %v1412
        %v1480 = vpop.f32.mrf.mxu0
        %v1481 = vadd.f32 0.0, %v1480
        %v1482 = vpop.f32.mrf.mxu0
        %1483 = vdwg.mxu0
        %s1484 = scalar_lea.vmem %s9, 32
        %v1485 = vld [vmem:[%s1484] sm:$0xff]
        %v1486 = vld [vmem:[%s1484 + $0x8] sm:$0xff]
        %v1487 = vld [vmem:[%s1484 + $0x10] sm:$0xff]
        %v1488 = vld [vmem:[%s1484 + $0x18] sm:$0xff]
        %s1489 = scalar_lea.vmem %s10, 1
        %v1490 = vld [vmem:[%s1489] sm:$0x1]
        %v1492 = vlaneseq
        %v1493 = vshrl.u32 %v1492, 7
        %v1494 = vsub.s32 0, %v1493
        %v1495 = vrot.slane %v1490, %v1494
        %v1498 = vsel %vm582, %v1481, 0
        %1500 = vmatprep.subr.mxu0 0.0
        %1501 = vmatpush1.msra.mxu0 0.0
        %1502 = vmatprep.subr.mxu0 0.0
        %1503 = vmatpush1.msra.mxu0 0.0
        %1504 = vmatprep.subr.mxu0 0.0
        %1505 = vmatpush1.msra.mxu0 0.0
        %1506 = vmatprep.subr.mxu0 0.0
        %1507 = vmatpush1.msra.mxu0 0.0
        %1508 = vmatprep.subr.mxu0 0.0
        %1509 = vmatpush1.msra.mxu0 0.0
        %1510 = vmatprep.subr.mxu0 0.0
        %1511 = vmatpush1.msra.mxu0 0.0
        %1512 = vmatprep.subr.mxu0 0.0
        %1513 = vmatpush1.msra.mxu0 0.0
        %1514 = vmatprep.subr.mxu0 0.0
        %1515 = vmatpush1.msra.mxu0 0.0
        %1516 = vmatprep.subr.mxu0 0.0
        %1517 = vmatpush1.msra.mxu0 0.0
        %1518 = vmatprep.subr.mxu0 0.0
        %1519 = vmatpush1.msra.mxu0 0.0
        %1520 = vmatprep.subr.mxu0 0.0
        %1521 = vmatpush1.msra.mxu0 0.0
        %1522 = vmatprep.subr.mxu0 0.0
        %1523 = vmatpush1.msra.mxu0 0.0
        %1524 = vmatprep.subr.mxu0 0.0
        %1525 = vmatpush1.msra.mxu0 %v1488
        %1526 = vmatprep.subr.mxu0 0.0
        %1527 = vmatpush1.msra.mxu0 %v1487
        %1528 = vmatprep.subr.mxu0 0.0
        %1529 = vmatpush1.msra.mxu0 %v1486
        %1530 = vmatprep.subr.mxu0 0.0
        %1531 = vmatpush1.msra.mxu0 %v1485
        %1532 = vmatprep.subr.mxu0 0.0
        %1533 = vmatpush2.msra.mxu0 0.0
        %1534 = vmatprep.subr.mxu0 0.0
        %1535 = vmatpush2.msra.mxu0 0.0
        %1536 = vmatprep.subr.mxu0 0.0
        %1537 = vmatpush2.msra.mxu0 0.0
        %1538 = vmatprep.subr.mxu0 0.0
        %1539 = vmatpush2.msra.mxu0 0.0
        %1540 = vmatprep.subr.mxu0 0.0
        %1541 = vmatpush2.msra.mxu0 0.0
        %1542 = vmatprep.subr.mxu0 0.0
        %1543 = vmatpush2.msra.mxu0 0.0
        %1544 = vmatprep.subr.mxu0 0.0
        %1545 = vmatpush2.msra.mxu0 0.0
        %1546 = vmatprep.subr.mxu0 0.0
        %1547 = vmatpush2.msra.mxu0 0.0
        %1548 = vmatprep.subr.mxu0 0.0
        %1549 = vmatpush2.msra.mxu0 0.0
        %1550 = vmatprep.subr.mxu0 0.0
        %1551 = vmatpush2.msra.mxu0 0.0
        %1552 = vmatprep.subr.mxu0 0.0
        %1553 = vmatpush2.msra.mxu0 0.0
        %1554 = vmatprep.subr.mxu0 0.0
        %1555 = vmatpush2.msra.mxu0 0.0
        %1556 = vmatprep.subr.mxu0 0.0
        %1557 = vmatpush2.msra.mxu0 0.0
        %1558 = vmatprep.subr.mxu0 0.0
        %1559 = vmatpush2.msra.mxu0 0.0
        %1560 = vmatprep.subr.mxu0 0.0
        %1561 = vmatpush2.msra.mxu0 0.0
        %1562 = vmatprep.subr.mxu0 0.0
        %1563 = vmatpush2.msra.mxu0 0.0
        %1564 = vmatprep.mubr.f32.mxu0 0.0
        %1565 = vmatmul.mubr.f32.gmra.mxu0 %v1498
        %v1566 = vpop.f32.mrf.mxu0
        %v1567 = vadd.f32 %v1495, %v1566
        %v1568 = vpop.f32.mrf.mxu0
        %1569 = vdwg.mxu0
        %v1570 = vadd.f32 %v1238, %v1567
        %v1571 = vmul.f32 %v1570, 0.70710677
        %v1572 = vadd.f32 %v1571, %v1114
        %v1573 = vmul.f32 %v1572, 0.70710677
        %v1574 = vld [vmem:[%s11] sm:$0xff]
        %v1575 = vld [vmem:[%s11 + $0x8] sm:$0xff]
        %v1576 = vld [vmem:[%s11 + $0x10] sm:$0xff]
        %v1577 = vld [vmem:[%s11 + $0x18] sm:$0xff]
        %v1578 = vld [vmem:[%s12] sm:$0x1]
        %v1580 = vlaneseq
        %v1581 = vshrl.u32 %v1580, 7
        %v1582 = vsub.s32 0, %v1581
        %v1583 = vrot.slane %v1578, %v1582
        %v1586 = vsel %vm582, %v1573, 0
        %1588 = vmatprep.subr.mxu0 0.0
        %1589 = vmatpush1.msra.mxu0 0.0
        %1590 = vmatprep.subr.mxu0 0.0
        %1591 = vmatpush1.msra.mxu0 0.0
        %1592 = vmatprep.subr.mxu0 0.0
        %1593 = vmatpush1.msra.mxu0 0.0
        %1594 = vmatprep.subr.mxu0 0.0
        %1595 = vmatpush1.msra.mxu0 0.0
        %1596 = vmatprep.subr.mxu0 0.0
        %1597 = vmatpush1.msra.mxu0 0.0
        %1598 = vmatprep.subr.mxu0 0.0
        %1599 = vmatpush1.msra.mxu0 0.0
        %1600 = vmatprep.subr.mxu0 0.0
        %1601 = vmatpush1.msra.mxu0 0.0
        %1602 = vmatprep.subr.mxu0 0.0
        %1603 = vmatpush1.msra.mxu0 0.0
        %1604 = vmatprep.subr.mxu0 0.0
        %1605 = vmatpush1.msra.mxu0 0.0
        %1606 = vmatprep.subr.mxu0 0.0
        %1607 = vmatpush1.msra.mxu0 0.0
        %1608 = vmatprep.subr.mxu0 0.0
        %1609 = vmatpush1.msra.mxu0 0.0
        %1610 = vmatprep.subr.mxu0 0.0
        %1611 = vmatpush1.msra.mxu0 0.0
        %1612 = vmatprep.subr.mxu0 0.0
        %1613 = vmatpush1.msra.mxu0 %v1577
        %1614 = vmatprep.subr.mxu0 0.0
        %1615 = vmatpush1.msra.mxu0 %v1576
        %1616 = vmatprep.subr.mxu0 0.0
        %1617 = vmatpush1.msra.mxu0 %v1575
        %1618 = vmatprep.subr.mxu0 0.0
        %1619 = vmatpush1.msra.mxu0 %v1574
        %1620 = vmatprep.subr.mxu0 0.0
        %1621 = vmatpush2.msra.mxu0 0.0
        %1622 = vmatprep.subr.mxu0 0.0
        %1623 = vmatpush2.msra.mxu0 0.0
        %1624 = vmatprep.subr.mxu0 0.0
        %1625 = vmatpush2.msra.mxu0 0.0
        %1626 = vmatprep.subr.mxu0 0.0
        %1627 = vmatpush2.msra.mxu0 0.0
        %1628 = vmatprep.subr.mxu0 0.0
        %1629 = vmatpush2.msra.mxu0 0.0
        %1630 = vmatprep.subr.mxu0 0.0
        %1631 = vmatpush2.msra.mxu0 0.0
        %1632 = vmatprep.subr.mxu0 0.0
        %1633 = vmatpush2.msra.mxu0 0.0
        %1634 = vmatprep.subr.mxu0 0.0
        %1635 = vmatpush2.msra.mxu0 0.0
        %1636 = vmatprep.subr.mxu0 0.0
        %1637 = vmatpush2.msra.mxu0 0.0
        %1638 = vmatprep.subr.mxu0 0.0
        %1639 = vmatpush2.msra.mxu0 0.0
        %1640 = vmatprep.subr.mxu0 0.0
        %1641 = vmatpush2.msra.mxu0 0.0
        %1642 = vmatprep.subr.mxu0 0.0
        %1643 = vmatpush2.msra.mxu0 0.0
        %1644 = vmatprep.subr.mxu0 0.0
        %1645 = vmatpush2.msra.mxu0 0.0
        %1646 = vmatprep.subr.mxu0 0.0
        %1647 = vmatpush2.msra.mxu0 0.0
        %1648 = vmatprep.subr.mxu0 0.0
        %1649 = vmatpush2.msra.mxu0 0.0
        %1650 = vmatprep.subr.mxu0 0.0
        %1651 = vmatpush2.msra.mxu0 0.0
        %1652 = vmatprep.mubr.f32.mxu0 0.0
        %1653 = vmatmul.mubr.f32.gmra.mxu0 %v1586
        %v1654 = vpop.f32.mrf.mxu0
        %v1655 = vadd.f32 %v1583, %v1654
        %v1656 = vpop.f32.mrf.mxu0
        %1657 = vdwg.mxu0
        %v1658 = vld [vmem:[%s13] sm:$0xff]
        %v1659 = vld [vmem:[%s13 + $0x8] sm:$0xff]
        %v1660 = vld [vmem:[%s13 + $0x10] sm:$0xff]
        %v1661 = vld [vmem:[%s13 + $0x18] sm:$0xff]
        %v1662 = vld [vmem:[%s14] sm:$0x1]
        %v1664 = vlaneseq
        %v1665 = vshrl.u32 %v1664, 7
        %v1666 = vsub.s32 0, %v1665
        %v1667 = vrot.slane %v1662, %v1666
        %v1670 = vsel %vm582, %v1655, 0
        %1672 = vmatprep.subr.mxu0 0.0
        %1673 = vmatpush1.msra.mxu0 0.0
        %1674 = vmatprep.subr.mxu0 0.0
        %1675 = vmatpush1.msra.mxu0 0.0
        %1676 = vmatprep.subr.mxu0 0.0
        %1677 = vmatpush1.msra.mxu0 0.0
        %1678 = vmatprep.subr.mxu0 0.0
        %1679 = vmatpush1.msra.mxu0 0.0
        %1680 = vmatprep.subr.mxu0 0.0
        %1681 = vmatpush1.msra.mxu0 0.0
        %1682 = vmatprep.subr.mxu0 0.0
        %1683 = vmatpush1.msra.mxu0 0.0
        %1684 = vmatprep.subr.mxu0 0.0
        %1685 = vmatpush1.msra.mxu0 0.0
        %1686 = vmatprep.subr.mxu0 0.0
        %1687 = vmatpush1.msra.mxu0 0.0
        %1688 = vmatprep.subr.mxu0 0.0
        %1689 = vmatpush1.msra.mxu0 0.0
        %1690 = vmatprep.subr.mxu0 0.0
        %1691 = vmatpush1.msra.mxu0 0.0
        %1692 = vmatprep.subr.mxu0 0.0
        %1693 = vmatpush1.msra.mxu0 0.0
        %1694 = vmatprep.subr.mxu0 0.0
        %1695 = vmatpush1.msra.mxu0 0.0
        %1696 = vmatprep.subr.mxu0 0.0
        %1697 = vmatpush1.msra.mxu0 %v1661
        %1698 = vmatprep.subr.mxu0 0.0
        %1699 = vmatpush1.msra.mxu0 %v1660
        %1700 = vmatprep.subr.mxu0 0.0
        %1701 = vmatpush1.msra.mxu0 %v1659
        %1702 = vmatprep.subr.mxu0 0.0
        %1703 = vmatpush1.msra.mxu0 %v1658
        %1704 = vmatprep.subr.mxu0 0.0
        %1705 = vmatpush2.msra.mxu0 0.0
        %1706 = vmatprep.subr.mxu0 0.0
        %1707 = vmatpush2.msra.mxu0 0.0
        %1708 = vmatprep.subr.mxu0 0.0
        %1709 = vmatpush2.msra.mxu0 0.0
        %1710 = vmatprep.subr.mxu0 0.0
        %1711 = vmatpush2.msra.mxu0 0.0
        %1712 = vmatprep.subr.mxu0 0.0
        %1713 = vmatpush2.msra.mxu0 0.0
        %1714 = vmatprep.subr.mxu0 0.0
        %1715 = vmatpush2.msra.mxu0 0.0
        %1716 = vmatprep.subr.mxu0 0.0
        %1717 = vmatpush2.msra.mxu0 0.0
        %1718 = vmatprep.subr.mxu0 0.0
        %1719 = vmatpush2.msra.mxu0 0.0
        %1720 = vmatprep.subr.mxu0 0.0
        %1721 = vmatpush2.msra.mxu0 0.0
        %1722 = vmatprep.subr.mxu0 0.0
        %1723 = vmatpush2.msra.mxu0 0.0
        %1724 = vmatprep.subr.mxu0 0.0
        %1725 = vmatpush2.msra.mxu0 0.0
        %1726 = vmatprep.subr.mxu0 0.0
        %1727 = vmatpush2.msra.mxu0 0.0
        %1728 = vmatprep.subr.mxu0 0.0
        %1729 = vmatpush2.msra.mxu0 0.0
        %1730 = vmatprep.subr.mxu0 0.0
        %1731 = vmatpush2.msra.mxu0 0.0
        %1732 = vmatprep.subr.mxu0 0.0
        %1733 = vmatpush2.msra.mxu0 0.0
        %1734 = vmatprep.subr.mxu0 0.0
        %1735 = vmatpush2.msra.mxu0 0.0
        %1736 = vmatprep.mubr.f32.mxu0 0.0
        %1737 = vmatmul.mubr.f32.gmra.mxu0 %v1670
        %v1738 = vpop.f32.mrf.mxu0
        %v1739 = vadd.f32 %v1667, %v1738
        %v1740 = vpop.f32.mrf.mxu0
        %1741 = vdwg.mxu0
        %1742 = vst [vmem:[%s544] sm:$0xff] %v1739
        %1743 = vst.msk [vmem:[%s551] sm:$0xff] %vm942, %v1410
        %s1744 = sand.u32 %s372, 1
        %s1745 = scalar_lea.sflag [#allocation3], %s1744
        %s1746 = sand.u32 %s372, 1
        %s1747 = smul.addr %s1746, 8
        %s1748 = scalar_lea.vmem [#allocation2], %s1747
        %s1749 = sand.u32 %s398, 1
        %s1750 = scalar_lea.sflag [#allocation5], %s1749
        %s1751 = sand.u32 %s398, 1
        %s1752 = smul.addr %s1751, 8
        %s1753 = scalar_lea.vmem [#allocation4], %s1752
        // Predicated region
        $region81: #{decoder_cnn_forward.1} parent=79 // pred_check
          %p1754 = pneg %p382
        $region82: #{decoder_cnn_forward.1} parent=79 // pred_check_branch
          %1756 = sbr.rel (%p1754) target = $region84
        $region83: #{decoder_cnn_forward.1} parent=79 // pred_region
          %s1758 = ssub.s32 128, 128
          %1759 = vsyncadd %s1745, %s1758
          %s1760 = smul.addr %s34, 128
          %s1761 = scalar_lea.hbm %s15, %s1760
          %s1763 = sshll.u32 %s1748, 4
          %s1764 = int_to_ptr.vmem [resolvable:$true] %s1763
          %1766 = dma.vmem_to_hbm [thread:$0]  %s1764, 128, %s1761, %s1745
        $region84: #{decoder_cnn_forward.1} parent=79 // pred_fallthru
          _
        // Predicated region
        $region85: #{decoder_cnn_forward.1} parent=79 // pred_check
          %p1767 = pneg %p408
        $region86: #{decoder_cnn_forward.1} parent=79 // pred_check_branch
          %1769 = sbr.rel (%p1767) target = $region88
        $region87: #{decoder_cnn_forward.1} parent=79 // pred_region
          %s1771 = ssub.s32 128, 128
          %1772 = vsyncadd %s1750, %s1771
          %s1773 = smul.addr %s34, 128
          %s1774 = scalar_lea.hbm %s16, %s1773
          %s1776 = sshll.u32 %s1753, 4
          %s1777 = int_to_ptr.vmem [resolvable:$true] %s1776
          %1779 = dma.vmem_to_hbm [thread:$0]  %s1777, 128, %s1774, %s1750
        $region88: #{decoder_cnn_forward.1} parent=79 // pred_fallthru
          _
      $region80: #{decoder_cnn_forward.1} parent=5 // pred_fallthru
        _
      %p1780 = scmp.le.s32.totalorder 2, %s29
      // Predicated region
      $region89: #{decoder_cnn_forward.1} parent=5 // pred_check
        %p1781 = pneg %p1780
      $region90: #{decoder_cnn_forward.1} parent=5 // pred_check_branch
        %1783 = sbr.rel (%p1781) target = $region92
      $region91: #{decoder_cnn_forward.1} parent=5 // pred_region
        %s1784 = ssub.s32 %s29, 2
        // Predicated region
        $region93: #{decoder_cnn_forward.1} parent=91 // pred_check
          %p1785 = pneg %p388
        $region94: #{decoder_cnn_forward.1} parent=91 // pred_check_branch
          %1787 = sbr.rel (%p1785) target = $region96
        $region95: #{decoder_cnn_forward.1} parent=91 // pred_region
          %s1788 = sand.u32 %s373, 1
          %s1789 = scalar_lea.sflag [#allocation3], %s1788
          %s1790 = sand.u32 %s373, 1
          %s1791 = smul.addr %s1790, 8
          %s1792 = scalar_lea.vmem [#allocation2], %s1791
          %1793 = dma.done %s1789, 128
        $region96: #{decoder_cnn_forward.1} parent=91 // pred_fallthru
          _
        // Predicated region
        $region97: #{decoder_cnn_forward.1} parent=91 // pred_check
          %p1794 = pneg %p414
        $region98: #{decoder_cnn_forward.1} parent=91 // pred_check_branch
          %1796 = sbr.rel (%p1794) target = $region100
        $region99: #{decoder_cnn_forward.1} parent=91 // pred_region
          %s1797 = sand.u32 %s399, 1
          %s1798 = scalar_lea.sflag [#allocation5], %s1797
          %s1799 = sand.u32 %s399, 1
          %s1800 = smul.addr %s1799, 8
          %s1801 = scalar_lea.vmem [#allocation4], %s1800
          %1802 = dma.done %s1798, 128
        $region100: #{decoder_cnn_forward.1} parent=91 // pred_fallthru
          _
      $region92: #{decoder_cnn_forward.1} parent=5 // pred_fallthru
        _
    $region6: #{decoder_cnn_forward.1} parent=1 // loop_footer
      %s33 = sadd.s32 1, %s29
    $region7: #{decoder_cnn_forward.1} parent=1 // loop_footer_branch
      %28 = sbr.rel target = $region3
    $region8: #{decoder_cnn_forward.1} parent=1 // loop_exit
      _
    %1803 = vsyncpa [#allocation3], 1
    %s1804 = scalar_lea.sflag [#allocation3], 1
    %1805 = vsyncpa %s1804, 1
    %1806 = vsyncpa [#allocation5], 1
    %s1807 = scalar_lea.sflag [#allocation5], 1
    %1808 = vsyncpa %s1807, 1

</llo_original>
